<compile_context>
chip_gen: v5e
topology: v5e:2x2
jax: 0.10.0
libtpu: 0.0.40
codegen_flags: <defaults>
</compile_context>

<pallas_src>
import functools
import math

import jax
import jax.numpy as jnp
from jax import lax
from jax.experimental import pallas as pl
from jax.experimental.pallas import tpu as pltpu


_NEG_INF = -1e30
_VMEM_LIMIT = 48 * 1024 * 1024   # > v5e 16MiB / v6e,v7x 32MiB defaults, < v7x 64MiB phys.


def _round_up(x, m):
    return ((x + m - 1) // m) * m


def _tile_pad(dim, preferred, align=8):
    """Pick a tile size and the padded dim it divides.

    If dim <= preferred: one tile covering the (slightly padded) dim.
    Else: tile = preferred (must be a multiple of 128) and the dim is padded up to it.
    Never falls back to a huge full-dimension tile.
    """
    if dim <= preferred:
        t = _round_up(dim, align)
        return t, t
    return preferred, _round_up(dim, preferred)


# ----------------------- tiled linear (matmul + bias) kernel -----------------------

def _linear_kernel(x_ref, w_ref, b_ref, o_ref, acc_ref):
    @pl.when(pl.program_id(2) == 0)
    def _init():
        acc_ref[...] = jnp.zeros_like(acc_ref)

    acc_ref[...] += jnp.dot(x_ref[...], w_ref[...], preferred_element_type=jnp.float32)

    @pl.when(pl.program_id(2) == pl.num_programs(2) - 1)
    def _store():
        o_ref[...] = (acc_ref[...] + b_ref[...].astype(jnp.float32)).astype(o_ref.dtype)


def linear(x, w, b, *, tm=512, tn=512, tk=512):
    """x: (M, K) @ w: (K, N) + b: (N,) -> (M, N), MXU-tiled with f32 accumulator."""
    M, K = x.shape
    K2, N = w.shape
    assert K == K2 and b.shape == (N,)

    tm, Mp = _tile_pad(M, tm, 8)
    tk, Kp = _tile_pad(K, tk, 8)
    tn, Np = _tile_pad(N, tn, 8)

    if (Mp, Kp) != (M, K):
        x = jnp.pad(x, ((0, Mp - M), (0, Kp - K)))
    if (Kp, Np) != (K, N):
        w = jnp.pad(w, ((0, Kp - K), (0, Np - N)))
    if Np != N:
        b = jnp.pad(b, (0, Np - N))

    grid = (Mp // tm, Np // tn, Kp // tk)
    itemsize = jnp.dtype(x.dtype).itemsize
    cost = pl.CostEstimate(
        flops=int(2 * Mp * Np * Kp),
        transcendentals=0,
        bytes_accessed=int(itemsize * (Mp * Kp * (Np // tn)      # x re-read per N tile
                                       + Kp * Np * (Mp // tm)    # w re-read per M tile
                                       + Mp * Np + Np)))

    out = pl.pallas_call(
        _linear_kernel,
        out_shape=jax.ShapeDtypeStruct((Mp, Np), x.dtype),
        grid=grid,
        in_specs=[
            pl.BlockSpec((tm, tk), lambda i, j, k: (i, k)),
            pl.BlockSpec((tk, tn), lambda i, j, k: (k, j)),
            pl.BlockSpec((1, tn), lambda i, j, k: (0, j)),
        ],
        out_specs=pl.BlockSpec((tm, tn), lambda i, j, k: (i, j)),
        scratch_shapes=[pltpu.VMEM((tm, tn), jnp.float32)],
        compiler_params=pltpu.CompilerParams(
            dimension_semantics=("parallel", "parallel", "arbitrary"),
            vmem_limit_bytes=_VMEM_LIMIT),
        cost_estimate=cost,
    )(x, w, b.reshape(1, Np))

    if (Mp, Np) != (M, N):
        out = out[:M, :N]
    return out


# ------------- online-softmax flash attention (compacted causal grid) --------------

def _flash_attn_kernel(qi_tab_ref, ki_tab_ref, q_ref, kt_ref, v_ref, o_ref,
                       m_scr, l_scr, acc_scr, *, scale, ts, approx_recip):
    t = pl.program_id(2)
    qi = qi_tab_ref[t]
    ki = ki_tab_ref[t]

    @pl.when(ki == 0)
    def _init():
        m_scr[...] = jnp.full_like(m_scr, _NEG_INF)
        l_scr[...] = jnp.zeros_like(l_scr)
        acc_scr[...] = jnp.zeros_like(acc_scr)

    q = q_ref[0, 0]      # (ts, D), input dtype (MXU-native)
    kt = kt_ref[0, 0]    # (D, ts), pre-transposed K -> no in-kernel transpose
    v = v_ref[0, 0]      # (ts, D)

    def _online_update(s):
        m_prev = m_scr[...]                                               # (ts, 1)
        m_new = jnp.maximum(m_prev, jnp.max(s, axis=-1, keepdims=True))
        alpha = jnp.exp(m_prev - m_new)
        p = jnp.exp(s - m_new)                                            # (ts, ts) f32
        l_scr[...] = alpha * l_scr[...] + jnp.sum(p, axis=-1, keepdims=True)
        pv = jnp.dot(p.astype(v.dtype), v, preferred_element_type=jnp.float32)
        acc_scr[...] = alpha * acc_scr[...] + pv
        m_scr[...] = m_new

    # Off-diagonal block: fully visible, no mask construction at all.
    @pl.when(ki < qi)
    def _off_diag():
        s = jnp.dot(q, kt, preferred_element_type=jnp.float32) * scale
        _online_update(s)

    # Diagonal block: local causal mask; it is also the last step of this query row,
    # so finalize (normalize + store) here.
    @pl.when(ki == qi)
    def _diag():
        s = jnp.dot(q, kt, preferred_element_type=jnp.float32) * scale
        row = lax.broadcasted_iota(jnp.int32, (ts, ts), 0)
        col = lax.broadcasted_iota(jnp.int32, (ts, ts), 1)
        s = jnp.where(col <= row, s, _NEG_INF)
        _online_update(s)
        inv_l = pl.reciprocal(l_scr[...], approx=approx_recip)            # EUP slot
        o_ref[0, 0] = (acc_scr[...] * inv_l).astype(o_ref.dtype)


def flash_attention(q, k_t, v, scale, *, block_size=512):
    """q, v: (B, H, S, D); k_t: (B, H, D, S). Returns unmasked attention (B, H, S, D).

    Causal. The grid is compacted to the lower triangle of (query-block, kv-block)
    pairs via scalar-prefetched lookup tables, so there are no skipped grid steps.
    """
    B, H, S, D = q.shape
    assert k_t.shape == (B, H, D, S) and v.shape == (B, H, S, D)

    s8 = _round_up(S, 8)
    if s8 <= block_size:
        ts, S_pad = s8, s8
    else:
        ts = _round_up(block_size, 128)       # lane-dense K block when multi-tile
        S_pad = _round_up(S, ts)

    if S_pad != S:
        pad = S_pad - S
        q = jnp.pad(q, ((0, 0), (0, 0), (0, pad), (0, 0)))
        k_t = jnp.pad(k_t, ((0, 0), (0, 0), (0, 0), (0, pad)))
        v = jnp.pad(v, ((0, 0), (0, 0), (0, pad), (0, 0)))

    nq = S_pad // ts
    # Lower-triangle (qi, ki) schedule, ki innermost (ascending) within each qi row.
    qi_list, ki_list = [], []
    for q_i in range(nq):
        for k_i in range(q_i + 1):
            qi_list.append(q_i)
            ki_list.append(k_i)
    T = len(qi_list)
    qi_tab = jnp.asarray(qi_list, dtype=jnp.int32)
    ki_tab = jnp.asarray(ki_list, dtype=jnp.int32)

    itemsize = jnp.dtype(q.dtype).itemsize
    n_blk = B * H * T
    cost = pl.CostEstimate(
        flops=int(4 * n_blk * ts * ts * D),                   # QK^T + PV, causal blocks only
        transcendentals=int(n_blk * ts * ts),                 # exp per processed score
        bytes_accessed=int(itemsize * (2 * B * H * S_pad * D  # Q read + O write
                                       + 2 * n_blk * ts * D)))  # K + V re-reads

    kernel = functools.partial(_flash_attn_kernel, scale=scale, ts=ts,
                               approx_recip=(q.dtype != jnp.float32))

    grid_spec = pltpu.PrefetchScalarGridSpec(
        num_scalar_prefetch=2,
        grid=(B, H, T),
        in_specs=[
            pl.BlockSpec((1, 1, ts, D), lambda b, h, t, qt, kt: (b, h, qt[t], 0)),
            pl.BlockSpec((1, 1, D, ts), lambda b, h, t, qt, kt: (b, h, 0, kt[t])),
            pl.BlockSpec((1, 1, ts, D), lambda b, h, t, qt, kt: (b, h, kt[t], 0)),
        ],
        out_specs=pl.BlockSpec((1, 1, ts, D), lambda b, h, t, qt, kt: (b, h, qt[t], 0)),
        scratch_shapes=[pltpu.VMEM((ts, 1), jnp.float32),   # running max m
                        pltpu.VMEM((ts, 1), jnp.float32),   # running denom l
                        pltpu.VMEM((ts, D), jnp.float32)],  # running numerator acc
    )

    out = pl.pallas_call(
        kernel,
        out_shape=jax.ShapeDtypeStruct((B, H, S_pad, D), q.dtype),
        grid_spec=grid_spec,
        compiler_params=pltpu.CompilerParams(
            dimension_semantics=("parallel", "parallel", "arbitrary"),
            vmem_limit_bytes=_VMEM_LIMIT),
        cost_estimate=cost,
    )(qi_tab, ki_tab, q, k_t, v)

    if S_pad != S:
        out = out[:, :, :S, :]
    return out


# ------------------------------ forward glue -------------------------------

def _sparse_head_mask(attn_router_output, num_heads, sp_threshold):
    """Torch: topk over router scores per (b, s) + prefill override. Returns (B, S, H) bool."""
    B, S, H = attn_router_output.shape
    k_sp = int(sp_threshold * num_heads)
    if k_sp > 0:
        _, topk_idx = lax.top_k(attn_router_output, k_sp)                         # (B, S, k)
        mask = jnp.sum(jax.nn.one_hot(topk_idx, H, dtype=jnp.float32), axis=-2) > 0
    else:
        mask = jnp.zeros((B, S, H), dtype=jnp.bool_)
    prefill_len = int(S * 0.8)
    mask = mask.at[:, :prefill_len, :].set(True)
    return mask


def prepare_params(params):
    """One-time weight prep outside the hot path: fuse q/k/v and pre-transpose to (in, out)."""
    w_qkv = jnp.concatenate([params["wq"], params["wk"], params["wv"]], axis=0).T  # (E, 3E)
    b_qkv = jnp.concatenate([params["bq"], params["bk"], params["bv"]], axis=0)    # (3E,)
    return dict(w_qkv=w_qkv, b_qkv=b_qkv, w_out=params["wo"].T, b_out=params["bo"])


def opt_flash_attention2_forward(hidden_states, attn_router_output, prep,
                                 num_heads, sp_threshold, output_attentions=True,
                                 attn_block_size=512):
    """Replicates OptFlashAttention2.forward (causal self-attn, no past_key_value,
    attention_mask=None, eval mode -> no dropout)."""
    # TODO(synk): padded/varlen path (attention_mask unpad/pad), cross-attention and
    # past_key_value caching are not implemented; only the causal self-attn path is.
    B, S, E = hidden_states.shape
    H = num_heads
    D = E // H
    dtype = hidden_states.dtype

    # Fused q/k/v projection: one pass over the activations instead of three.
    qkv = linear(hidden_states.reshape(B * S, E), prep["w_qkv"], prep["b_qkv"])
    qkv = qkv.reshape(B, S, 3, H, D)
    q = jnp.transpose(qkv[:, :, 0], (0, 2, 1, 3))    # (B, H, S, D)
    k_t = jnp.transpose(qkv[:, :, 1], (0, 2, 3, 1))  # (B, H, D, S) lane-dense K
    v = jnp.transpose(qkv[:, :, 2], (0, 2, 1, 3))    # (B, H, S, D)

    scale = 1.0 / math.sqrt(D)   # flash_attn default softmax_scale
    oh = flash_attention(q, k_t, v, scale, block_size=attn_block_size)             # (B, H, S, D)

    attn_head_output = jnp.transpose(oh, (0, 2, 1, 3))                              # (B, S, H, D)

    # Sparse-head mask from router output (torch: topk + scatter + prefill override),
    # applied once in JAX (no duplicated masked output stream from the kernel).
    mask = _sparse_head_mask(attn_router_output, H, sp_threshold)                   # (B, S, H)
    attn_masked = attn_head_output * mask[..., None].astype(dtype)
    attn_weights_reshaped = attn_masked.reshape(B, S, E)

    attn_output = linear(attn_weights_reshaped.reshape(B * S, E),
                         prep["w_out"], prep["b_out"]).reshape(B, S, E)

    if not output_attentions:
        attn_weights_reshaped = None
    past_key_value = None   # is_decoder=False
    return attn_output, attn_weights_reshaped, past_key_value, attn_head_output


# ------------------------------- pure-JAX reference -------------------------------

def _reference_forward(hidden_states, attn_router_output, params, num_heads, sp_threshold):
    B, S, E = hidden_states.shape
    H = num_heads
    D = E // H
    q = hidden_states @ params["wq"].T + params["bq"]
    k = hidden_states @ params["wk"].T + params["bk"]
    v = hidden_states @ params["wv"].T + params["bv"]

    def split(t):
        return jnp.transpose(t.reshape(B, S, H, D), (0, 2, 1, 3))

    qh, kh, vh = split(q), split(k), split(v)
    s = jnp.einsum("bhqd,bhkd->bhqk", qh, kh) / math.sqrt(D)
    causal = jnp.tril(jnp.ones((S, S), dtype=jnp.bool_))
    s = jnp.where(causal, s, -jnp.inf)
    p = jax.nn.softmax(s, axis=-1)
    o = jnp.einsum("bhqk,bhkd->bhqd", p, vh)
    attn_head = jnp.transpose(o, (0, 2, 1, 3))                                      # (B, S, H, D)
    mask = _sparse_head_mask(attn_router_output, H, sp_threshold)
    attn_masked = (attn_head * mask[..., None].astype(attn_head.dtype)).reshape(B, S, E)
    attn_out = attn_masked @ params["wo"].T + params["bo"]
    return attn_out, attn_masked, attn_head


# --------------------------------- main -------------------------------------

if __name__ == "__main__":
    dtype = jnp.float32

    def make_inputs(key, B, S, E, H):
        ks = jax.random.split(key, 10)

        def init_linear(kw, kb, fan_in, fan_out):
            bound = 1.0 / math.sqrt(fan_in)
            w = jax.random.uniform(kw, (fan_out, fan_in), dtype, -bound, bound)  # torch (out,in)
            b = jax.random.uniform(kb, (fan_out,), dtype, -bound, bound)
            return w, b

        wq, bq = init_linear(ks[0], ks[1], E, E)
        wk, bk = init_linear(ks[2], ks[3], E, E)
        wv, bv = init_linear(ks[4], ks[5], E, E)
        wo, bo = init_linear(ks[6], ks[7], E, E)
        params = dict(wq=wq, bq=bq, wk=wk, bk=bk, wv=wv, bv=bv, wo=wo, bo=bo)
        hidden = jax.random.normal(ks[8], (B, S, E), dtype)
        router = jax.random.normal(ks[9], (B, S, H), dtype)
        return params, hidden, router

    # ---- config 1: small OPT-like shapes from the module spec ----
    B, S, E, H = 2, 8, 32, 4
    sp_threshold = 0.5   # keep top-2 of 4 heads outside the prefill region
    key = jax.random.PRNGKey(0)
    params, hidden_states, attn_router_output = make_inputs(key, B, S, E, H)
    prep = prepare_params(params)

    fwd = jax.jit(functools.partial(opt_flash_attention2_forward,
                                    num_heads=H, sp_threshold=sp_threshold))
    attn_out, attn_w, past_kv, attn_head_out = fwd(hidden_states, attn_router_output, prep)
    jax.block_until_ready(attn_out)
    jax.block_until_ready(attn_head_out)

    assert attn_out.shape == (B, S, E)
    assert attn_w.shape == (B, S, E)
    assert attn_head_out.shape == (B, S, H, E // H)
    assert past_kv is None

    ref_out, ref_w, ref_head = _reference_forward(
        hidden_states, attn_router_output, params, H, sp_threshold)
    assert jnp.allclose(attn_out, ref_out, rtol=2e-2, atol=2e-2)
    assert jnp.allclose(attn_w, ref_w, rtol=2e-2, atol=2e-2)
    assert jnp.allclose(attn_head_out, ref_head, rtol=2e-2, atol=2e-2)

    # ---- config 2: exercises the compacted multi-block causal grid + seq padding ----
    B2, S2, E2, H2 = 1, 200, 32, 4
    params2, hidden2, router2 = make_inputs(jax.random.PRNGKey(1), B2, S2, E2, H2)
    prep2 = prepare_params(params2)
    fwd2 = jax.jit(functools.partial(opt_flash_attention2_forward,
                                     num_heads=H2, sp_threshold=sp_threshold,
                                     attn_block_size=128))
    out2, w2, _, head2 = fwd2(hidden2, router2, prep2)
    jax.block_until_ready(out2)
    ref_out2, ref_w2, ref_head2 = _reference_forward(hidden2, router2, params2, H2, sp_threshold)
    assert jnp.allclose(out2, ref_out2, rtol=2e-2, atol=2e-2)
    assert jnp.allclose(w2, ref_w2, rtol=2e-2, atol=2e-2)
    assert jnp.allclose(head2, ref_head2, rtol=2e-2, atol=2e-2)

    print("KERNEL_OK")
</pallas_src>

<mosaic_0001>
module attributes {stable_mosaic.version = 11 : i64} {
  func.func @_linear_kernel(%arg0: i32, %arg1: i32, %arg2: i32, %arg3: memref<16x32xf32, #tpu.memory_space<vmem>>, %arg4: memref<32x96xf32, #tpu.memory_space<vmem>>, %arg5: memref<1x96xf32, #tpu.memory_space<vmem>>, %arg6: memref<16x96xf32, #tpu.memory_space<vmem>>, %arg7: memref<16x96xf32, #tpu.memory_space<vmem>>) attributes {dimension_semantics = [#tpu.dimension_semantics<parallel>, #tpu.dimension_semantics<parallel>, #tpu.dimension_semantics<arbitrary>], iteration_bounds = array<i64: 1, 1, 1>, scalar_prefetch = 0 : i64, scratch_operands = 1 : i64, tpu.core_type = #tpu.core_type<tc>, window_params = [{transform_indices = @transform_0, window_bounds = array<i64: 16, 32>}, {transform_indices = @transform_1, window_bounds = array<i64: 32, 96>}, {transform_indices = @transform_2, window_bounds = array<i64: 1, 96>}, {transform_indices = @transform_3, window_bounds = array<i64: 16, 96>}]} {
    %c0_i32 = arith.constant 0 : i32
    %0 = arith.cmpi eq, %arg2, %c0_i32 : i32
    %1 = arith.extui %0 : i1 to i32
    %c0_i32_0 = arith.constant 0 : i32
    %2 = arith.cmpi ne, %1, %c0_i32_0 : i32
    scf.if %2 {
      %cst_10 = arith.constant 0.000000e+00 : f32
      %12 = vector.broadcast %cst_10 : f32 to vector<16x96xf32>
      %c0_11 = arith.constant 0 : index
      %c0_12 = arith.constant 0 : index
      %13 = vector.load %arg7[%c0_11, %c0_12] : memref<16x96xf32, #tpu.memory_space<vmem>>, vector<16x96xf32>
      tpu.vector_store %arg7[%c0_11, %c0_12], %12 {strides = array<i32>} : memref<16x96xf32, #tpu.memory_space<vmem>>, vector<16x96xf32>,
    } else {
    }
    %c0 = arith.constant 0 : index
    %c0_1 = arith.constant 0 : index
    %3 = vector.load %arg7[%c0, %c0_1] : memref<16x96xf32, #tpu.memory_space<vmem>>, vector<16x96xf32>
    %c0_2 = arith.constant 0 : index
    %c0_3 = arith.constant 0 : index
    %4 = vector.load %arg3[%c0_2, %c0_3] : memref<16x32xf32, #tpu.memory_space<vmem>>, vector<16x32xf32>
    %c0_4 = arith.constant 0 : index
    %c0_5 = arith.constant 0 : index
    %5 = vector.load %arg4[%c0_4, %c0_5] : memref<32x96xf32, #tpu.memory_space<vmem>>, vector<32x96xf32>
    %cst = arith.constant dense<0.000000e+00> : vector<16x96xf32>
    %6 = tpu.matmul %4, %5, %cst {dimension_numbers = #tpu.dot_dimension_numbers<[1], [0], [0], [1], [0, 0, 1, 1], [], []>} : vector<16x32xf32>, vector<32x96xf32>, vector<16x96xf32> -> vector<16x96xf32>
    %7 = arith.addf %3, %6 : vector<16x96xf32>
    %c0_6 = arith.constant 0 : index
    %c0_7 = arith.constant 0 : index
    %8 = vector.load %arg7[%c0_6, %c0_7] : memref<16x96xf32, #tpu.memory_space<vmem>>, vector<16x96xf32>
    tpu.vector_store %arg7[%c0_6, %c0_7], %7 {strides = array<i32>} : memref<16x96xf32, #tpu.memory_space<vmem>>, vector<16x96xf32>,
    %c0_i32_8 = arith.constant 0 : i32
    %9 = arith.cmpi eq, %arg2, %c0_i32_8 : i32
    %10 = arith.extui %9 : i1 to i32
    %c0_i32_9 = arith.constant 0 : i32
    %11 = arith.cmpi ne, %10, %c0_i32_9 : i32
    scf.if %11 {
      %c0_10 = arith.constant 0 : index
      %c0_11 = arith.constant 0 : index
      %12 = vector.load %arg7[%c0_10, %c0_11] : memref<16x96xf32, #tpu.memory_space<vmem>>, vector<16x96xf32>
      %c0_12 = arith.constant 0 : index
      %c0_13 = arith.constant 0 : index
      %13 = vector.load %arg5[%c0_12, %c0_13] : memref<1x96xf32, #tpu.memory_space<vmem>>, vector<1x96xf32>
      %14 = vector.broadcast %13 : vector<1x96xf32> to vector<16x96xf32>
      %15 = arith.addf %12, %14 : vector<16x96xf32>
      %c0_14 = arith.constant 0 : index
      %c0_15 = arith.constant 0 : index
      %16 = vector.load %arg6[%c0_14, %c0_15] : memref<16x96xf32, #tpu.memory_space<vmem>>, vector<16x96xf32>
      tpu.vector_store %arg6[%c0_14, %c0_15], %15 {strides = array<i32>} : memref<16x96xf32, #tpu.memory_space<vmem>>, vector<16x96xf32>,
    } else {
    }
    return
  }
  func.func @transform_0(%arg0: i32, %arg1: i32, %arg2: i32) -> (i32, i32) {
    %c0_i32 = arith.constant 0 : i32
    return %arg0, %arg2 : i32, i32
  }
  func.func @transform_1(%arg0: i32, %arg1: i32, %arg2: i32) -> (i32, i32) {
    %c0_i32 = arith.constant 0 : i32
    return %arg2, %arg1 : i32, i32
  }
  func.func @transform_2(%arg0: i32, %arg1: i32, %arg2: i32) -> (i32, i32) {
    %c0_i32 = arith.constant 0 : i32
    %c0_i32_0 = arith.constant 0 : i32
    return %c0_i32, %arg1 : i32, i32
  }
  func.func @transform_3(%arg0: i32, %arg1: i32, %arg2: i32) -> (i32, i32) {
    %c0_i32 = arith.constant 0 : i32
    return %arg0, %arg1 : i32, i32
  }
}

module attributes {stable_mosaic.version = 11 : i64} {
  func.func @_flash_attn_kernel(%arg0: i32, %arg1: i32, %arg2: i32, %arg3: memref<1xi32, #tpu.memory_space<smem>>, %arg4: memref<1xi32, #tpu.memory_space<smem>>, %arg5: memref<1x1x8x8xf32, #tpu.memory_space<vmem>>, %arg6: memref<1x1x8x8xf32, #tpu.memory_space<vmem>>, %arg7: memref<1x1x8x8xf32, #tpu.memory_space<vmem>>, %arg8: memref<1x1x8x8xf32, #tpu.memory_space<vmem>>, %arg9: memref<8x1xf32, #tpu.memory_space<vmem>>, %arg10: memref<8x1xf32, #tpu.memory_space<vmem>>, %arg11: memref<8x8xf32, #tpu.memory_space<vmem>>) attributes {dimension_semantics = [#tpu.dimension_semantics<parallel>, #tpu.dimension_semantics<parallel>, #tpu.dimension_semantics<arbitrary>], iteration_bounds = array<i64: 2, 4, 1>, scalar_prefetch = 2 : i64, scratch_operands = 3 : i64, tpu.core_type = #tpu.core_type<tc>, window_params = [{transform_indices = @transform_0, window_bounds = array<i64: 1, 1, 8, 8>}, {transform_indices = @transform_1, window_bounds = array<i64: 1, 1, 8, 8>}, {transform_indices = @transform_2, window_bounds = array<i64: 1, 1, 8, 8>}, {transform_indices = @transform_3, window_bounds = array<i64: 1, 1, 8, 8>}]} {
    %0 = arith.index_cast %arg2 : i32 to index
    %1 = memref.load %arg3[%0] : memref<1xi32, #tpu.memory_space<smem>>
    %2 = arith.index_cast %arg2 : i32 to index
    %3 = memref.load %arg4[%2] : memref<1xi32, #tpu.memory_space<smem>>
    %c0_i32 = arith.constant 0 : i32
    %4 = arith.cmpi eq, %3, %c0_i32 : i32
    %5 = arith.extui %4 : i1 to i32
    %c0_i32_0 = arith.constant 0 : i32
    %6 = arith.cmpi ne, %5, %c0_i32_0 : i32
    scf.if %6 {
      %cst = arith.constant -1.000000e+30 : f32
      %19 = vector.broadcast %cst : f32 to vector<8x1xf32>
      %c0_14 = arith.constant 0 : index
      %c0_15 = arith.constant 0 : index
      %20 = vector.load %arg9[%c0_14, %c0_15] : memref<8x1xf32, #tpu.memory_space<vmem>>, vector<8x1xf32>
      tpu.vector_store %arg9[%c0_14, %c0_15], %19 {strides = array<i32>} : memref<8x1xf32, #tpu.memory_space<vmem>>, vector<8x1xf32>,
      %cst_16 = arith.constant 0.000000e+00 : f32
      %21 = vector.broadcast %cst_16 : f32 to vector<8x1xf32>
      %c0_17 = arith.constant 0 : index
      %c0_18 = arith.constant 0 : index
      %22 = vector.load %arg10[%c0_17, %c0_18] : memref<8x1xf32, #tpu.memory_space<vmem>>, vector<8x1xf32>
      tpu.vector_store %arg10[%c0_17, %c0_18], %21 {strides = array<i32>} : memref<8x1xf32, #tpu.memory_space<vmem>>, vector<8x1xf32>,
      %cst_19 = arith.constant 0.000000e+00 : f32
      %23 = vector.broadcast %cst_19 : f32 to vector<8x8xf32>
      %c0_20 = arith.constant 0 : index
      %c0_21 = arith.constant 0 : index
      %24 = vector.load %arg11[%c0_20, %c0_21] : memref<8x8xf32, #tpu.memory_space<vmem>>, vector<8x8xf32>
      tpu.vector_store %arg11[%c0_20, %c0_21], %23 {strides = array<i32>} : memref<8x8xf32, #tpu.memory_space<vmem>>, vector<8x8xf32>,
    } else {
    }
    %c0 = arith.constant 0 : index
    %c0_1 = arith.constant 0 : index
    %c0_2 = arith.constant 0 : index
    %c0_3 = arith.constant 0 : index
    %7 = vector.load %arg5[%c0, %c0_1, %c0_2, %c0_3] : memref<1x1x8x8xf32, #tpu.memory_space<vmem>>, vector<1x1x8x8xf32>
    %8 = vector.shape_cast %7 : vector<1x1x8x8xf32> to vector<8x8xf32>
    %c0_4 = arith.constant 0 : index
    %c0_5 = arith.constant 0 : index
    %c0_6 = arith.constant 0 : index
    %c0_7 = arith.constant 0 : index
    %9 = vector.load %arg6[%c0_4, %c0_5, %c0_6, %c0_7] : memref<1x1x8x8xf32, #tpu.memory_space<vmem>>, vector<1x1x8x8xf32>
    %10 = vector.shape_cast %9 : vector<1x1x8x8xf32> to vector<8x8xf32>
    %c0_8 = arith.constant 0 : index
    %c0_9 = arith.constant 0 : index
    %c0_10 = arith.constant 0 : index
    %c0_11 = arith.constant 0 : index
    %11 = vector.load %arg7[%c0_8, %c0_9, %c0_10, %c0_11] : memref<1x1x8x8xf32, #tpu.memory_space<vmem>>, vector<1x1x8x8xf32>
    %12 = vector.shape_cast %11 : vector<1x1x8x8xf32> to vector<8x8xf32>
    %13 = arith.cmpi slt, %3, %1 : i32
    %14 = arith.extui %13 : i1 to i32
    %c0_i32_12 = arith.constant 0 : i32
    %15 = arith.cmpi ne, %14, %c0_i32_12 : i32
    scf.if %15 {
      %cst = arith.constant dense<0.000000e+00> : vector<8x8xf32>
      %19 = tpu.matmul %8, %10, %cst {dimension_numbers = #tpu.dot_dimension_numbers<[1], [0], [0], [1], [0, 0, 1, 1], [], []>} : vector<8x8xf32>, vector<8x8xf32>, vector<8x8xf32> -> vector<8x8xf32>
      %cst_14 = arith.constant 0.353553385 : f32
      %20 = vector.broadcast %cst_14 : f32 to vector<8x8xf32>
      %21 = arith.mulf %19, %20 : vector<8x8xf32>
      %c0_15 = arith.constant 0 : index
      %c0_16 = arith.constant 0 : index
      %22 = vector.load %arg9[%c0_15, %c0_16] : memref<8x1xf32, #tpu.memory_space<vmem>>, vector<8x1xf32>
      %cst_17 = arith.constant dense<0xFF800000> : vector<8xf32>
      %23 = vector.multi_reduction <maximumf>, %21, %cst_17 [1] : vector<8x8xf32> to vector<8xf32>
      %24 = vector.shape_cast %23 : vector<8xf32> to vector<8x1xf32>
      %25 = arith.maximumf %22, %24 : vector<8x1xf32>
      %26 = arith.subf %22, %25 : vector<8x1xf32>
      %27 = math.exp %26 : vector<8x1xf32>
      %28 = vector.broadcast %25 : vector<8x1xf32> to vector<8x8xf32>
      %29 = arith.subf %21, %28 : vector<8x8xf32>
      %30 = math.exp %29 : vector<8x8xf32>
      %c0_18 = arith.constant 0 : index
      %c0_19 = arith.constant 0 : index
      %31 = vector.load %arg10[%c0_18, %c0_19] : memref<8x1xf32, #tpu.memory_space<vmem>>, vector<8x1xf32>
      %32 = arith.mulf %27, %31 : vector<8x1xf32>
      %cst_20 = arith.constant dense<0.000000e+00> : vector<8xf32>
      %33 = vector.multi_reduction <add>, %30, %cst_20 [1] : vector<8x8xf32> to vector<8xf32>
      %34 = vector.shape_cast %33 : vector<8xf32> to vector<8x1xf32>
      %35 = arith.addf %32, %34 : vector<8x1xf32>
      %c0_21 = arith.constant 0 : index
      %c0_22 = arith.constant 0 : index
      %36 = vector.load %arg10[%c0_21, %c0_22] : memref<8x1xf32, #tpu.memory_space<vmem>>, vector<8x1xf32>
      tpu.vector_store %arg10[%c0_21, %c0_22], %35 {strides = array<i32>} : memref<8x1xf32, #tpu.memory_space<vmem>>, vector<8x1xf32>,
      %cst_23 = arith.constant dense<0.000000e+00> : vector<8x8xf32>
      %37 = tpu.matmul %30, %12, %cst_23 {dimension_numbers = #tpu.dot_dimension_numbers<[1], [0], [0], [1], [0, 0, 1, 1], [], []>} : vector<8x8xf32>, vector<8x8xf32>, vector<8x8xf32> -> vector<8x8xf32>
      %c0_24 = arith.constant 0 : index
      %c0_25 = arith.constant 0 : index
      %38 = vector.load %arg11[%c0_24, %c0_25] : memref<8x8xf32, #tpu.memory_space<vmem>>, vector<8x8xf32>
      %39 = vector.broadcast %27 : vector<8x1xf32> to vector<8x8xf32>
      %40 = arith.mulf %39, %38 : vector<8x8xf32>
      %41 = arith.addf %40, %37 : vector<8x8xf32>
      %c0_26 = arith.constant 0 : index
      %c0_27 = arith.constant 0 : index
      %42 = vector.load %arg11[%c0_26, %c0_27] : memref<8x8xf32, #tpu.memory_space<vmem>>, vector<8x8xf32>
      tpu.vector_store %arg11[%c0_26, %c0_27], %41 {strides = array<i32>} : memref<8x8xf32, #tpu.memory_space<vmem>>, vector<8x8xf32>,
      %c0_28 = arith.constant 0 : index
      %c0_29 = arith.constant 0 : index
      %43 = vector.load %arg9[%c0_28, %c0_29] : memref<8x1xf32, #tpu.memory_space<vmem>>, vector<8x1xf32>
      tpu.vector_store %arg9[%c0_28, %c0_29], %25 {strides = array<i32>} : memref<8x1xf32, #tpu.memory_space<vmem>>, vector<8x1xf32>,
    } else {
    }
    %16 = arith.cmpi eq, %3, %1 : i32
    %17 = arith.extui %16 : i1 to i32
    %c0_i32_13 = arith.constant 0 : i32
    %18 = arith.cmpi ne, %17, %c0_i32_13 : i32
    scf.if %18 {
      %cst = arith.constant dense<0.000000e+00> : vector<8x8xf32>
      %19 = tpu.matmul %8, %10, %cst {dimension_numbers = #tpu.dot_dimension_numbers<[1], [0], [0], [1], [0, 0, 1, 1], [], []>} : vector<8x8xf32>, vector<8x8xf32>, vector<8x8xf32> -> vector<8x8xf32>
      %cst_14 = arith.constant 0.353553385 : f32
      %20 = vector.broadcast %cst_14 : f32 to vector<8x8xf32>
      %21 = arith.mulf %19, %20 : vector<8x8xf32>
      %22 = tpu.iota {dimensions = array<i32: 0>} : vector<8x8xi32>
      %23 = tpu.iota {dimensions = array<i32: 1>} : vector<8x8xi32>
      %24 = arith.cmpi sle, %23, %22 : vector<8x8xi32>
      %cst_15 = arith.constant -1.000000e+30 : f32
      %25 = vector.broadcast %cst_15 : f32 to vector<8x8xf32>
      %26 = arith.select %24, %21, %25 : vector<8x8xi1>, vector<8x8xf32>
      %c0_16 = arith.constant 0 : index
      %c0_17 = arith.constant 0 : index
      %27 = vector.load %arg9[%c0_16, %c0_17] : memref<8x1xf32, #tpu.memory_space<vmem>>, vector<8x1xf32>
      %cst_18 = arith.constant dense<0xFF800000> : vector<8xf32>
      %28 = vector.multi_reduction <maximumf>, %26, %cst_18 [1] : vector<8x8xf32> to vector<8xf32>
      %29 = vector.shape_cast %28 : vector<8xf32> to vector<8x1xf32>
      %30 = arith.maximumf %27, %29 : vector<8x1xf32>
      %31 = arith.subf %27, %30 : vector<8x1xf32>
      %32 = math.exp %31 : vector<8x1xf32>
      %33 = vector.broadcast %30 : vector<8x1xf32> to vector<8x8xf32>
      %34 = arith.subf %26, %33 : vector<8x8xf32>
      %35 = math.exp %34 : vector<8x8xf32>
      %c0_19 = arith.constant 0 : index
      %c0_20 = arith.constant 0 : index
      %36 = vector.load %arg10[%c0_19, %c0_20] : memref<8x1xf32, #tpu.memory_space<vmem>>, vector<8x1xf32>
      %37 = arith.mulf %32, %36 : vector<8x1xf32>
      %cst_21 = arith.constant dense<0.000000e+00> : vector<8xf32>
      %38 = vector.multi_reduction <add>, %35, %cst_21 [1] : vector<8x8xf32> to vector<8xf32>
      %39 = vector.shape_cast %38 : vector<8xf32> to vector<8x1xf32>
      %40 = arith.addf %37, %39 : vector<8x1xf32>
      %c0_22 = arith.constant 0 : index
      %c0_23 = arith.constant 0 : index
      %41 = vector.load %arg10[%c0_22, %c0_23] : memref<8x1xf32, #tpu.memory_space<vmem>>, vector<8x1xf32>
      tpu.vector_store %arg10[%c0_22, %c0_23], %40 {strides = array<i32>} : memref<8x1xf32, #tpu.memory_space<vmem>>, vector<8x1xf32>,
      %cst_24 = arith.constant dense<0.000000e+00> : vector<8x8xf32>
      %42 = tpu.matmul %35, %12, %cst_24 {dimension_numbers = #tpu.dot_dimension_numbers<[1], [0], [0], [1], [0, 0, 1, 1], [], []>} : vector<8x8xf32>, vector<8x8xf32>, vector<8x8xf32> -> vector<8x8xf32>
      %c0_25 = arith.constant 0 : index
      %c0_26 = arith.constant 0 : index
      %43 = vector.load %arg11[%c0_25, %c0_26] : memref<8x8xf32, #tpu.memory_space<vmem>>, vector<8x8xf32>
      %44 = vector.broadcast %32 : vector<8x1xf32> to vector<8x8xf32>
      %45 = arith.mulf %44, %43 : vector<8x8xf32>
      %46 = arith.addf %45, %42 : vector<8x8xf32>
      %c0_27 = arith.constant 0 : index
      %c0_28 = arith.constant 0 : index
      %47 = vector.load %arg11[%c0_27, %c0_28] : memref<8x8xf32, #tpu.memory_space<vmem>>, vector<8x8xf32>
      tpu.vector_store %arg11[%c0_27, %c0_28], %46 {strides = array<i32>} : memref<8x8xf32, #tpu.memory_space<vmem>>, vector<8x8xf32>,
      %c0_29 = arith.constant 0 : index
      %c0_30 = arith.constant 0 : index
      %48 = vector.load %arg9[%c0_29, %c0_30] : memref<8x1xf32, #tpu.memory_space<vmem>>, vector<8x1xf32>
      tpu.vector_store %arg9[%c0_29, %c0_30], %30 {strides = array<i32>} : memref<8x1xf32, #tpu.memory_space<vmem>>, vector<8x1xf32>,
      %c0_31 = arith.constant 0 : index
      %c0_32 = arith.constant 0 : index
      %49 = vector.load %arg10[%c0_31, %c0_32] : memref<8x1xf32, #tpu.memory_space<vmem>>, vector<8x1xf32>
      %50 = tpu.reciprocal %49 : vector<8x1xf32> -> vector<8x1xf32>
      %c0_33 = arith.constant 0 : index
      %c0_34 = arith.constant 0 : index
      %51 = vector.load %arg11[%c0_33, %c0_34] : memref<8x8xf32, #tpu.memory_space<vmem>>, vector<8x8xf32>
      %52 = vector.broadcast %50 : vector<8x1xf32> to vector<8x8xf32>
      %53 = arith.mulf %51, %52 : vector<8x8xf32>
      %c0_35 = arith.constant 0 : index
      %c0_36 = arith.constant 0 : index
      %c0_37 = arith.constant 0 : index
      %c0_38 = arith.constant 0 : index
      %54 = vector.load %arg8[%c0_35, %c0_36, %c0_37, %c0_38] : memref<1x1x8x8xf32, #tpu.memory_space<vmem>>, vector<1x1x8x8xf32>
      %55 = vector.shape_cast %54 : vector<1x1x8x8xf32> to vector<8x8xf32>
      %56 = vector.shape_cast %53 : vector<8x8xf32> to vector<1x1x8x8xf32>
      tpu.vector_store %arg8[%c0_35, %c0_36, %c0_37, %c0_38], %56 {strides = array<i32>} : memref<1x1x8x8xf32, #tpu.memory_space<vmem>>, vector<1x1x8x8xf32>,
    } else {
    }
    return
  }
  func.func @transform_0(%arg0: i32, %arg1: i32, %arg2: i32, %arg3: memref<1xi32, #tpu.memory_space<smem>>, %arg4: memref<1xi32, #tpu.memory_space<smem>>) -> (i32, i32, i32, i32) {
    %0 = arith.index_cast %arg2 : i32 to index
    %1 = memref.load %arg3[%0] : memref<1xi32, #tpu.memory_space<smem>>
    %c0_i32 = arith.constant 0 : i32
    %c0_i32_0 = arith.constant 0 : i32
    return %arg0, %arg1, %1, %c0_i32 : i32, i32, i32, i32
  }
  func.func @transform_1(%arg0: i32, %arg1: i32, %arg2: i32, %arg3: memref<1xi32, #tpu.memory_space<smem>>, %arg4: memref<1xi32, #tpu.memory_space<smem>>) -> (i32, i32, i32, i32) {
    %0 = arith.index_cast %arg2 : i32 to index
    %1 = memref.load %arg4[%0] : memref<1xi32, #tpu.memory_space<smem>>
    %c0_i32 = arith.constant 0 : i32
    %c0_i32_0 = arith.constant 0 : i32
    return %arg0, %arg1, %c0_i32, %1 : i32, i32, i32, i32
  }
  func.func @transform_2(%arg0: i32, %arg1: i32, %arg2: i32, %arg3: memref<1xi32, #tpu.memory_space<smem>>, %arg4: memref<1xi32, #tpu.memory_space<smem>>) -> (i32, i32, i32, i32) {
    %0 = arith.index_cast %arg2 : i32 to index
    %1 = memref.load %arg4[%0] : memref<1xi32, #tpu.memory_space<smem>>
    %c0_i32 = arith.constant 0 : i32
    %c0_i32_0 = arith.constant 0 : i32
    return %arg0, %arg1, %1, %c0_i32 : i32, i32, i32, i32
  }
  func.func @transform_3(%arg0: i32, %arg1: i32, %arg2: i32, %arg3: memref<1xi32, #tpu.memory_space<smem>>, %arg4: memref<1xi32, #tpu.memory_space<smem>>) -> (i32, i32, i32, i32) {
    %0 = arith.index_cast %arg2 : i32 to index
    %1 = memref.load %arg3[%0] : memref<1xi32, #tpu.memory_space<smem>>
    %c0_i32 = arith.constant 0 : i32
    %c0_i32_0 = arith.constant 0 : i32
    return %arg0, %arg1, %1, %c0_i32 : i32, i32, i32, i32
  }
}

module attributes {stable_mosaic.version = 11 : i64} {
  func.func @_linear_kernel(%arg0: i32, %arg1: i32, %arg2: i32, %arg3: memref<16x32xf32, #tpu.memory_space<vmem>>, %arg4: memref<32x32xf32, #tpu.memory_space<vmem>>, %arg5: memref<1x32xf32, #tpu.memory_space<vmem>>, %arg6: memref<16x32xf32, #tpu.memory_space<vmem>>, %arg7: memref<16x32xf32, #tpu.memory_space<vmem>>) attributes {dimension_semantics = [#tpu.dimension_semantics<parallel>, #tpu.dimension_semantics<parallel>, #tpu.dimension_semantics<arbitrary>], iteration_bounds = array<i64: 1, 1, 1>, scalar_prefetch = 0 : i64, scratch_operands = 1 : i64, tpu.core_type = #tpu.core_type<tc>, window_params = [{transform_indices = @transform_0, window_bounds = array<i64: 16, 32>}, {transform_indices = @transform_1, window_bounds = array<i64: 32, 32>}, {transform_indices = @transform_2, window_bounds = array<i64: 1, 32>}, {transform_indices = @transform_3, window_bounds = array<i64: 16, 32>}]} {
    %c0_i32 = arith.constant 0 : i32
    %0 = arith.cmpi eq, %arg2, %c0_i32 : i32
    %1 = arith.extui %0 : i1 to i32
    %c0_i32_0 = arith.constant 0 : i32
    %2 = arith.cmpi ne, %1, %c0_i32_0 : i32
    scf.if %2 {
      %cst_10 = arith.constant 0.000000e+00 : f32
      %12 = vector.broadcast %cst_10 : f32 to vector<16x32xf32>
      %c0_11 = arith.constant 0 : index
      %c0_12 = arith.constant 0 : index
      %13 = vector.load %arg7[%c0_11, %c0_12] : memref<16x32xf32, #tpu.memory_space<vmem>>, vector<16x32xf32>
      tpu.vector_store %arg7[%c0_11, %c0_12], %12 {strides = array<i32>} : memref<16x32xf32, #tpu.memory_space<vmem>>, vector<16x32xf32>,
    } else {
    }
    %c0 = arith.constant 0 : index
    %c0_1 = arith.constant 0 : index
    %3 = vector.load %arg7[%c0, %c0_1] : memref<16x32xf32, #tpu.memory_space<vmem>>, vector<16x32xf32>
    %c0_2 = arith.constant 0 : index
    %c0_3 = arith.constant 0 : index
    %4 = vector.load %arg3[%c0_2, %c0_3] : memref<16x32xf32, #tpu.memory_space<vmem>>, vector<16x32xf32>
    %c0_4 = arith.constant 0 : index
    %c0_5 = arith.constant 0 : index
    %5 = vector.load %arg4[%c0_4, %c0_5] : memref<32x32xf32, #tpu.memory_space<vmem>>, vector<32x32xf32>
    %cst = arith.constant dense<0.000000e+00> : vector<16x32xf32>
    %6 = tpu.matmul %4, %5, %cst {dimension_numbers = #tpu.dot_dimension_numbers<[1], [0], [0], [1], [0, 0, 1, 1], [], []>} : vector<16x32xf32>, vector<32x32xf32>, vector<16x32xf32> -> vector<16x32xf32>
    %7 = arith.addf %3, %6 : vector<16x32xf32>
    %c0_6 = arith.constant 0 : index
    %c0_7 = arith.constant 0 : index
    %8 = vector.load %arg7[%c0_6, %c0_7] : memref<16x32xf32, #tpu.memory_space<vmem>>, vector<16x32xf32>
    tpu.vector_store %arg7[%c0_6, %c0_7], %7 {strides = array<i32>} : memref<16x32xf32, #tpu.memory_space<vmem>>, vector<16x32xf32>,
    %c0_i32_8 = arith.constant 0 : i32
    %9 = arith.cmpi eq, %arg2, %c0_i32_8 : i32
    %10 = arith.extui %9 : i1 to i32
    %c0_i32_9 = arith.constant 0 : i32
    %11 = arith.cmpi ne, %10, %c0_i32_9 : i32
    scf.if %11 {
      %c0_10 = arith.constant 0 : index
      %c0_11 = arith.constant 0 : index
      %12 = vector.load %arg7[%c0_10, %c0_11] : memref<16x32xf32, #tpu.memory_space<vmem>>, vector<16x32xf32>
      %c0_12 = arith.constant 0 : index
      %c0_13 = arith.constant 0 : index
      %13 = vector.load %arg5[%c0_12, %c0_13] : memref<1x32xf32, #tpu.memory_space<vmem>>, vector<1x32xf32>
      %14 = vector.broadcast %13 : vector<1x32xf32> to vector<16x32xf32>
      %15 = arith.addf %12, %14 : vector<16x32xf32>
      %c0_14 = arith.constant 0 : index
      %c0_15 = arith.constant 0 : index
      %16 = vector.load %arg6[%c0_14, %c0_15] : memref<16x32xf32, #tpu.memory_space<vmem>>, vector<16x32xf32>
      tpu.vector_store %arg6[%c0_14, %c0_15], %15 {strides = array<i32>} : memref<16x32xf32, #tpu.memory_space<vmem>>, vector<16x32xf32>,
    } else {
    }
    return
  }
  func.func @transform_0(%arg0: i32, %arg1: i32, %arg2: i32) -> (i32, i32) {
    %c0_i32 = arith.constant 0 : i32
    return %arg0, %arg2 : i32, i32
  }
  func.func @transform_1(%arg0: i32, %arg1: i32, %arg2: i32) -> (i32, i32) {
    %c0_i32 = arith.constant 0 : i32
    return %arg2, %arg1 : i32, i32
  }
  func.func @transform_2(%arg0: i32, %arg1: i32, %arg2: i32) -> (i32, i32) {
    %c0_i32 = arith.constant 0 : i32
    %c0_i32_0 = arith.constant 0 : i32
    return %c0_i32, %arg1 : i32, i32
  }
  func.func @transform_3(%arg0: i32, %arg1: i32, %arg2: i32) -> (i32, i32) {
    %c0_i32 = arith.constant 0 : i32
    return %arg0, %arg1 : i32, i32
  }
}

</mosaic_0001>

<llo_original>
// kernel: opt_flash_attention2_forward.3
$region0: #{opt_flash_attention2_forward.3}
  #allocation0 [shape = 'u32[]', space=smem, size = 0x4, offset = 0x4, fixed_abs, tag = 'smem constant byte address 0x4 - core index']
  #allocation1 [shape = 'u32[72,128]{1,0:T(1,128)}', space=vmem, size = 0x9000, scoped, tag = 'internal scratch']
  #allocation2 [shape = 'f32[16,96]{1,0:T(8,128)}', space=vmem, size = 0x2000, scoped, tag = 'scratch operand']
  %s0 = inlined_call_operand.vmem [shape: f32[16,32], index: 0, kind: input, shape index: {}]
  %s1 = inlined_call_operand.vmem [shape: f32[32,96], index: 1, kind: input, shape index: {}]
  %s2 = inlined_call_operand.vmem [shape: f32[1,96], index: 2, kind: input, shape index: {}]
  %s3 = inlined_call_operand.vmem [shape: f32[16,96], index: 3, kind: output, shape index: {}]
  %s4 = sld [smem:[#allocation0]]
  $region30: #{opt_flash_attention2_forward.3} parent=0
    _
  %s6 = ssub.s32 1, %s4
  %s7 = scalar_select 0, %s6, %s4
  // Predicated region
  $region2: #{opt_flash_attention2_forward.3} parent=0 // pred_check
    _
  $region3: #{opt_flash_attention2_forward.3} parent=0 // pred_check_branch
    %9 = sbr.rel (0) target = $region5
  $region4: #{opt_flash_attention2_forward.3} parent=0 // pred_region
    _
  $region5: #{opt_flash_attention2_forward.3} parent=0 // pred_fallthru
    _
  // Predicated region
  $region6: #{opt_flash_attention2_forward.3} parent=0 // pred_check
    _
  $region7: #{opt_flash_attention2_forward.3} parent=0 // pred_check_branch
    %11 = sbr.rel (0) target = $region9
  $region8: #{opt_flash_attention2_forward.3} parent=0 // pred_region
    _
  $region9: #{opt_flash_attention2_forward.3} parent=0 // pred_fallthru
    _
  // Predicated region
  $region10: #{opt_flash_attention2_forward.3} parent=0 // pred_check
    _
  $region11: #{opt_flash_attention2_forward.3} parent=0 // pred_check_branch
    %13 = sbr.rel (0) target = $region13
  $region12: #{opt_flash_attention2_forward.3} parent=0 // pred_region
    _
  $region13: #{opt_flash_attention2_forward.3} parent=0 // pred_fallthru
    _
  %p14 = scmp.eq.s32.totalorder 0, 0
  // Predicated region
  $region14: #{opt_flash_attention2_forward.3} parent=0 // pred_check
    %p15 = pneg %p14
  $region15: #{opt_flash_attention2_forward.3} parent=0 // pred_check_branch
    %17 = sbr.rel (%p15) target = $region17
  $region16: #{opt_flash_attention2_forward.3} parent=0 // pred_region
    %vm18 = vcmask 785408
    %19 = vst.msk [vmem:[#allocation2] sm:$0xff] %vm18, 0.0
    %20 = vst.msk [vmem:[#allocation2 + $0x8] sm:$0xff] %vm18, 0.0
  $region17: #{opt_flash_attention2_forward.3} parent=0 // pred_fallthru
    _
  %v21 = vld [vmem:[#allocation2] sm:$0xff]
  %v22 = vld [vmem:[#allocation2 + $0x8] sm:$0xff]
  %v23 = vld [vmem:[%s0] sm:$0xff]
  %v24 = vld [vmem:[%s0 + $0x8] sm:$0xff]
  %v25 = vld [vmem:[%s1] sm:$0xff]
  %v26 = vld [vmem:[%s1 + $0x8] sm:$0xff]
  %v27 = vld [vmem:[%s1 + $0x10] sm:$0xff]
  %v28 = vld [vmem:[%s1 + $0x18] sm:$0xff]
  %vm29 = vcmask 261120
  %v31 = vsel %vm29, %v23, 0
  %v34 = vsel %vm29, %v24, 0
  %36 = vmatpush.msra.mxu0 0.0
  %37 = vmatpush.msra.mxu0 0.0
  %38 = vmatpush.msra.mxu0 0.0
  %39 = vmatpush.msra.mxu0 0.0
  %40 = vmatpush.msra.mxu0 0.0
  %41 = vmatpush.msra.mxu0 0.0
  %42 = vmatpush.msra.mxu0 0.0
  %43 = vmatpush.msra.mxu0 0.0
  %44 = vmatpush.msra.mxu0 0.0
  %45 = vmatpush.msra.mxu0 0.0
  %46 = vmatpush.msra.mxu0 0.0
  %47 = vmatpush.msra.mxu0 0.0
  %48 = vmatpush.msra.mxu0 %v28
  %49 = vmatpush.msra.mxu0 %v27
  %50 = vmatpush.msra.mxu0 %v26
  %51 = vmatpush.msra.mxu0 %v25
  %52 = vmatmul.f32.gmra.mxu0 %v31
  %v53 = vpop.f32.mrf.mxu0
  %v54 = vadd.f32 0.0, %v53
  %55 = vmatmul.f32.gmra.mxu0 %v34
  %v56 = vpop.f32.mrf.mxu0
  %v57 = vadd.f32 0.0, %v56
  %58 = vdwg.mxu0
  %v59 = vadd.f32 %v21, %v54
  %v60 = vadd.f32 %v22, %v57
  %vm61 = vcmask 785408
  %62 = vst.msk [vmem:[#allocation2] sm:$0xff] %vm61, %v59
  %63 = vst.msk [vmem:[#allocation2 + $0x8] sm:$0xff] %vm61, %v60
  // Predicated region
  $region18: #{opt_flash_attention2_forward.3} parent=0 // pred_check
    %p64 = pneg %p14
  $region19: #{opt_flash_attention2_forward.3} parent=0 // pred_check_branch
    %66 = sbr.rel (%p64) target = $region21
  $region20: #{opt_flash_attention2_forward.3} parent=0 // pred_region
    %v67 = vld [vmem:[#allocation2] sm:$0xff]
    %v68 = vld [vmem:[#allocation2 + $0x8] sm:$0xff]
    %v69 = vld [vmem:[%s2] sm:$0x1]
    %v71 = vperm.slane %v69, 0
    %v73 = vadd.f32 %v67, %v71
    %v74 = vadd.f32 %v68, %v71
    %75 = vst.msk [vmem:[%s3] sm:$0xff] %vm61, %v73
    %76 = vst.msk [vmem:[%s3 + $0x8] sm:$0xff] %vm61, %v74
  $region21: #{opt_flash_attention2_forward.3} parent=0 // pred_fallthru
    _
  // Predicated region
  $region22: #{opt_flash_attention2_forward.3} parent=0 // pred_check
    _
  $region23: #{opt_flash_attention2_forward.3} parent=0 // pred_check_branch
    %78 = sbr.rel (0) target = $region25
  $region24: #{opt_flash_attention2_forward.3} parent=0 // pred_region
    _
  $region25: #{opt_flash_attention2_forward.3} parent=0 // pred_fallthru
    _
  // Predicated region
  $region26: #{opt_flash_attention2_forward.3} parent=0 // pred_check
    _
  $region27: #{opt_flash_attention2_forward.3} parent=0 // pred_check_branch
    %80 = sbr.rel (0) target = $region29
  $region28: #{opt_flash_attention2_forward.3} parent=0 // pred_region
    _
  $region29: #{opt_flash_attention2_forward.3} parent=0 // pred_fallthru
    _

// kernel: opt_flash_attention2_forward.4
$region0: #{opt_flash_attention2_forward.4}
  #allocation0 [shape = 'u32[]', space=smem, size = 0x4, offset = 0x4, fixed_abs, tag = 'smem constant byte address 0x4 - core index']
  #allocation1 [shape = 'u32[72,128]{1,0:T(1,128)}', space=vmem, size = 0x9000, scoped, tag = 'internal scratch']
  #allocation2 [shape = 'f32[8,1]{1,0:T(8,128)}', space=vmem, size = 0x1000, scoped, tag = 'scratch operand']
  #allocation3 [shape = 'f32[8,1]{1,0:T(8,128)}', space=vmem, size = 0x1000, scoped, tag = 'scratch operand']
  #allocation4 [shape = 'f32[8,8]{1,0:T(8,128)}', space=vmem, size = 0x1000, scoped, tag = 'scratch operand']
  #allocation5 [shape = 's32[1]{0}', space=sflag, size = 0x4, scoped, tag = 'scoped memory for opt_flash_attention2_forward.4']
  #allocation6 [shape = 's32[1]{0:T(128)S(6)}', space=smem, size = 0x200, scoped, tag = 'prefetched SMEM operand 0']
  #allocation7 [shape = 's32[1]{0:T(128)S(6)}', space=smem, size = 0x200, scoped, tag = 'prefetched SMEM operand 1']
  %s0 = inlined_call_operand.<no memory space> [shape: s32[1], index: 0, kind: input, shape index: {}, may-alias: {0,1}]
  %s1 = inlined_call_operand.<no memory space> [shape: s32[1], index: 1, kind: input, shape index: {}, may-alias: {0,1}]
  %s2 = inlined_call_operand.vmem [shape: f32[2,4,8,8], index: 2, kind: input, shape index: {}]
  %s3 = inlined_call_operand.vmem [shape: f32[2,4,8,8], index: 3, kind: input, shape index: {}]
  %s4 = inlined_call_operand.vmem [shape: f32[2,4,8,8], index: 4, kind: input, shape index: {}]
  %s5 = inlined_call_operand.vmem [shape: f32[2,4,8,8], index: 5, kind: output, shape index: {}]
  %s6 = sld [smem:[#allocation0]]
  $region57: #{opt_flash_attention2_forward.4} parent=0
    _
  %s8 = ssub.s32 1, %s6
  %s9 = scalar_select 0, %s8, %s6
  %10 = sst [smem:[#allocation6]] %s0
  %11 = sst [smem:[#allocation7]] %s1
  loop: start=0, step=1, limit=10
  $region2: #{opt_flash_attention2_forward.4} parent=0 // loop_pre_header
    _
  $region3: #{opt_flash_attention2_forward.4} parent=0 // loop_header
    %s13 = sphi 0, %s17
    %p14 = scmp.ge.s32.totalorder %s13, 10
    %s20 = sphi 0, %s39
    %s21 = sphi 0, %s35
    %s22 = sphi 0, %s31
    %s23 = sphi 0, %s20
    %s24 = sphi 0, %s21
    %s25 = sphi 0, %s22
    %s26 = sphi 0, %s23
    %s27 = sphi 0, %s24
    %s28 = sphi 0, %s25
    %s48 = sphi 0, %s50
    %s51 = sphi 0, %s48
    %s52 = sphi 0, %s51
    %s68 = sphi 0, %s52
    %s80 = sphi 0, %s82
    %s83 = sphi 0, %s80
    %s84 = sphi 0, %s83
    %s100 = sphi 0, %s84
    %s112 = sphi 0, %s114
    %s115 = sphi 0, %s112
    %s116 = sphi 0, %s115
    %s132 = sphi 0, %s116
    %s144 = sphi 0, %s146
    %s147 = sphi 0, %s144
    %s148 = sphi 0, %s147
    %s164 = sphi 0, %s148
  $region4: #{opt_flash_attention2_forward.4} parent=0 // loop_header_branch
    %16 = sbr.rel (%p14) target = $region8
  $region5: #{opt_flash_attention2_forward.4} parent=0 // loop_body
    %s18 = ssub.s32 %s13, 1
    %s19 = ssub.s32 %s13, 2
    %s29 = sadd.s32 1, %s22
    %p30 = scmp.ge.s32.totalorder %s29, 1
    %s31 = scalar_select %p30, 0, %s29
    %s32 = sadd.s32 1, %s21
    %s33 = scalar_select %p30, %s32, %s21
    %p34 = scmp.ge.s32.totalorder %s33, 4
    %s35 = scalar_select %p34, 0, %s33
    %s36 = sadd.s32 1, %s20
    %s37 = scalar_select %p34, %s36, %s20
    %p38 = scmp.ge.s32.totalorder %s37, 2
    %s39 = scalar_select %p38, 0, %s37
    %s40 = sld [smem:[#allocation6 + %s22]]
    %s41 = sld [smem:[#allocation6 + %s31]]
    %s42 = ssub.s32 %s20, %s39
    %s43 = ssub.s32 %s21, %s35
    %s44 = sor.u32 %s42, %s43
    %s45 = ssub.s32 %s40, %s41
    %s46 = sor.u32 %s44, %s45
    %p47 = scmp.eq.s32.totalorder %s46, 0
    %s49 = sadd.s32 %s48, 1
    %s50 = scalar_select %p47, %s48, %s49
    %p53 = pneg %p47
    %p54 = scmp.eq.s32.totalorder %s13, 7
    %p55 = por %p53, %p54
    %p56 = scmp.ne.s32.totalorder %s48, %s51
    %p57 = scmp.eq.s32.totalorder %s13, 0
    %p58 = por %p56, %p57
    %p59 = scmp.ne.s32.totalorder %s48, %s51
    %p60 = scmp.eq.s32.totalorder %s18, 7
    %p61 = por %p59, %p60
    %p62 = scmp.ne.s32.totalorder %s51, %s52
    %p63 = scmp.eq.s32.totalorder %s18, 0
    %p64 = por %p62, %p63
    %p65 = scmp.ne.s32.totalorder %s51, %s52
    %p66 = scmp.eq.s32.totalorder %s19, 7
    %p67 = por %p65, %p66
    %p69 = scmp.ne.s32.totalorder %s52, %s68
    %p70 = scmp.eq.s32.totalorder %s19, 0
    %p71 = por %p69, %p70
    %s72 = sld [smem:[#allocation7 + %s22]]
    %s73 = sld [smem:[#allocation7 + %s31]]
    %s74 = ssub.s32 %s20, %s39
    %s75 = ssub.s32 %s21, %s35
    %s76 = sor.u32 %s74, %s75
    %s77 = ssub.s32 %s72, %s73
    %s78 = sor.u32 %s76, %s77
    %p79 = scmp.eq.s32.totalorder %s78, 0
    %s81 = sadd.s32 %s80, 1
    %s82 = scalar_select %p79, %s80, %s81
    %p85 = pneg %p79
    %p86 = scmp.eq.s32.totalorder %s13, 7
    %p87 = por %p85, %p86
    %p88 = scmp.ne.s32.totalorder %s80, %s83
    %p89 = scmp.eq.s32.totalorder %s13, 0
    %p90 = por %p88, %p89
    %p91 = scmp.ne.s32.totalorder %s80, %s83
    %p92 = scmp.eq.s32.totalorder %s18, 7
    %p93 = por %p91, %p92
    %p94 = scmp.ne.s32.totalorder %s83, %s84
    %p95 = scmp.eq.s32.totalorder %s18, 0
    %p96 = por %p94, %p95
    %p97 = scmp.ne.s32.totalorder %s83, %s84
    %p98 = scmp.eq.s32.totalorder %s19, 7
    %p99 = por %p97, %p98
    %p101 = scmp.ne.s32.totalorder %s84, %s100
    %p102 = scmp.eq.s32.totalorder %s19, 0
    %p103 = por %p101, %p102
    %s104 = sld [smem:[#allocation7 + %s22]]
    %s105 = sld [smem:[#allocation7 + %s31]]
    %s106 = ssub.s32 %s20, %s39
    %s107 = ssub.s32 %s21, %s35
    %s108 = sor.u32 %s106, %s107
    %s109 = ssub.s32 %s104, %s105
    %s110 = sor.u32 %s108, %s109
    %p111 = scmp.eq.s32.totalorder %s110, 0
    %s113 = sadd.s32 %s112, 1
    %s114 = scalar_select %p111, %s112, %s113
    %p117 = pneg %p111
    %p118 = scmp.eq.s32.totalorder %s13, 7
    %p119 = por %p117, %p118
    %p120 = scmp.ne.s32.totalorder %s112, %s115
    %p121 = scmp.eq.s32.totalorder %s13, 0
    %p122 = por %p120, %p121
    %p123 = scmp.ne.s32.totalorder %s112, %s115
    %p124 = scmp.eq.s32.totalorder %s18, 7
    %p125 = por %p123, %p124
    %p126 = scmp.ne.s32.totalorder %s115, %s116
    %p127 = scmp.eq.s32.totalorder %s18, 0
    %p128 = por %p126, %p127
    %p129 = scmp.ne.s32.totalorder %s115, %s116
    %p130 = scmp.eq.s32.totalorder %s19, 7
    %p131 = por %p129, %p130
    %p133 = scmp.ne.s32.totalorder %s116, %s132
    %p134 = scmp.eq.s32.totalorder %s19, 0
    %p135 = por %p133, %p134
    %s136 = sld [smem:[#allocation6 + %s22]]
    %s137 = sld [smem:[#allocation6 + %s31]]
    %s138 = ssub.s32 %s20, %s39
    %s139 = ssub.s32 %s21, %s35
    %s140 = sor.u32 %s138, %s139
    %s141 = ssub.s32 %s136, %s137
    %s142 = sor.u32 %s140, %s141
    %p143 = scmp.eq.s32.totalorder %s142, 0
    %s145 = sadd.s32 %s144, 1
    %s146 = scalar_select %p143, %s144, %s145
    %p149 = pneg %p143
    %p150 = scmp.eq.s32.totalorder %s13, 7
    %p151 = por %p149, %p150
    %p152 = scmp.ne.s32.totalorder %s144, %s147
    %p153 = scmp.eq.s32.totalorder %s13, 0
    %p154 = por %p152, %p153
    %p155 = scmp.ne.s32.totalorder %s144, %s147
    %p156 = scmp.eq.s32.totalorder %s18, 7
    %p157 = por %p155, %p156
    %p158 = scmp.ne.s32.totalorder %s147, %s148
    %p159 = scmp.eq.s32.totalorder %s18, 0
    %p160 = por %p158, %p159
    %p161 = scmp.ne.s32.totalorder %s147, %s148
    %p162 = scmp.eq.s32.totalorder %s19, 7
    %p163 = por %p161, %p162
    %p165 = scmp.ne.s32.totalorder %s148, %s164
    %p166 = scmp.eq.s32.totalorder %s19, 0
    %p167 = por %p165, %p166
    %p168 = scmp.le.s32.totalorder 1, %s13
    %p169 = scmp.lt.s32.totalorder %s13, 9
    %p170 = pnand %p168, %p169
    %p171 = pneg %p170
    // Predicated region
    $region9: #{opt_flash_attention2_forward.4} parent=5 // pred_check
      _
    $region10: #{opt_flash_attention2_forward.4} parent=5 // pred_check_branch
      %173 = sbr.rel (%p170) target = $region12
    $region11: #{opt_flash_attention2_forward.4} parent=5 // pred_region
      %s174 = ssub.s32 %s13, 1
    $region12: #{opt_flash_attention2_forward.4} parent=5 // pred_fallthru
      _
    %p175 = scmp.lt.s32.totalorder %s13, 8
    // Predicated region
    $region13: #{opt_flash_attention2_forward.4} parent=5 // pred_check
      %p176 = pneg %p175
    $region14: #{opt_flash_attention2_forward.4} parent=5 // pred_check_branch
      %178 = sbr.rel (%p176) target = $region16
    $region15: #{opt_flash_attention2_forward.4} parent=5 // pred_region
      // Predicated region
      $region17: #{opt_flash_attention2_forward.4} parent=15 // pred_check
        %p179 = pneg %p58
      $region18: #{opt_flash_attention2_forward.4} parent=15 // pred_check_branch
        %181 = sbr.rel (%p179) target = $region20
      $region19: #{opt_flash_attention2_forward.4} parent=15 // pred_region
        %s182 = sld [smem:[#allocation6 + %s22]]
        %p183 = scmp.lt.s32.totalorder %s20, 1
        %s184 = scalar_select %p183, %s20, 1
        %p185 = scmp.lt.s32.totalorder %s21, 3
        %s186 = scalar_select %p185, %s21, 3
        %p187 = scmp.lt.s32.totalorder %s182, 0
        %s188 = scalar_select %p187, %s182, 0
        %s189 = sadd.s32 %s188, %s186
        %s190 = smul.addr %s184, 4
        %s191 = sadd.s32 %s189, %s190
        %s192 = smul.addr %s191, 8
        %s193 = scalar_lea.vmem %s2, %s192
        %s194 = sld [smem:[#allocation6 + %s22]]
      $region20: #{opt_flash_attention2_forward.4} parent=15 // pred_fallthru
        _
      // Predicated region
      $region21: #{opt_flash_attention2_forward.4} parent=15 // pred_check
        %p195 = pneg %p90
      $region22: #{opt_flash_attention2_forward.4} parent=15 // pred_check_branch
        %197 = sbr.rel (%p195) target = $region24
      $region23: #{opt_flash_attention2_forward.4} parent=15 // pred_region
        %s198 = sld [smem:[#allocation7 + %s22]]
        %p199 = scmp.lt.s32.totalorder %s20, 1
        %s200 = scalar_select %p199, %s20, 1
        %p201 = scmp.lt.s32.totalorder %s21, 3
        %s202 = scalar_select %p201, %s21, 3
        %p203 = scmp.lt.s32.totalorder %s198, 0
        %s204 = scalar_select %p203, %s198, 0
        %s205 = sadd.s32 %s204, %s202
        %s206 = smul.addr %s200, 4
        %s207 = sadd.s32 %s205, %s206
        %s208 = smul.addr %s207, 8
        %s209 = scalar_lea.vmem %s3, %s208
        %s210 = sld [smem:[#allocation7 + %s22]]
      $region24: #{opt_flash_attention2_forward.4} parent=15 // pred_fallthru
        _
      // Predicated region
      $region25: #{opt_flash_attention2_forward.4} parent=15 // pred_check
        %p211 = pneg %p122
      $region26: #{opt_flash_attention2_forward.4} parent=15 // pred_check_branch
        %213 = sbr.rel (%p211) target = $region28
      $region27: #{opt_flash_attention2_forward.4} parent=15 // pred_region
        %s214 = sld [smem:[#allocation7 + %s22]]
        %p215 = scmp.lt.s32.totalorder %s20, 1
        %s216 = scalar_select %p215, %s20, 1
        %p217 = scmp.lt.s32.totalorder %s21, 3
        %s218 = scalar_select %p217, %s21, 3
        %p219 = scmp.lt.s32.totalorder %s214, 0
        %s220 = scalar_select %p219, %s214, 0
        %s221 = sadd.s32 %s220, %s218
        %s222 = smul.addr %s216, 4
        %s223 = sadd.s32 %s221, %s222
        %s224 = smul.addr %s223, 8
        %s225 = scalar_lea.vmem %s4, %s224
        %s226 = sld [smem:[#allocation7 + %s22]]
      $region28: #{opt_flash_attention2_forward.4} parent=15 // pred_fallthru
        _
    $region16: #{opt_flash_attention2_forward.4} parent=5 // pred_fallthru
      _
    %p227 = scmp.le.s32.totalorder 1, %s13
    %p228 = scmp.lt.s32.totalorder %s13, 9
    %p229 = pnand %p227, %p228
    %p230 = pneg %p229
    // Predicated region
    $region29: #{opt_flash_attention2_forward.4} parent=5 // pred_check
      _
    $region30: #{opt_flash_attention2_forward.4} parent=5 // pred_check_branch
      %232 = sbr.rel (%p229) target = $region32
    $region31: #{opt_flash_attention2_forward.4} parent=5 // pred_region
      %s233 = ssub.s32 %s13, 1
      %s234 = sld [smem:[#allocation6 + %s25]]
      %p235 = scmp.lt.s32.totalorder %s23, 1
      %s236 = scalar_select %p235, %s23, 1
      %p237 = scmp.lt.s32.totalorder %s24, 3
      %s238 = scalar_select %p237, %s24, 3
      %p239 = scmp.lt.s32.totalorder %s234, 0
      %s240 = scalar_select %p239, %s234, 0
      %s241 = sadd.s32 %s240, %s238
      %s242 = smul.addr %s236, 4
      %s243 = sadd.s32 %s241, %s242
      %s244 = smul.addr %s243, 8
      %s245 = scalar_lea.vmem %s2, %s244
      %p246 = pneg %p64
      %p247 = pneg %p61
      %s248 = sld [smem:[#allocation7 + %s25]]
      %p249 = scmp.lt.s32.totalorder %s23, 1
      %s250 = scalar_select %p249, %s23, 1
      %p251 = scmp.lt.s32.totalorder %s24, 3
      %s252 = scalar_select %p251, %s24, 3
      %p253 = scmp.lt.s32.totalorder %s248, 0
      %s254 = scalar_select %p253, %s248, 0
      %s255 = sadd.s32 %s254, %s252
      %s256 = smul.addr %s250, 4
      %s257 = sadd.s32 %s255, %s256
      %s258 = smul.addr %s257, 8
      %s259 = scalar_lea.vmem %s3, %s258
      %p260 = pneg %p96
      %p261 = pneg %p93
      %s262 = sld [smem:[#allocation7 + %s25]]
      %p263 = scmp.lt.s32.totalorder %s23, 1
      %s264 = scalar_select %p263, %s23, 1
      %p265 = scmp.lt.s32.totalorder %s24, 3
      %s266 = scalar_select %p265, %s24, 3
      %p267 = scmp.lt.s32.totalorder %s262, 0
      %s268 = scalar_select %p267, %s262, 0
      %s269 = sadd.s32 %s268, %s266
      %s270 = smul.addr %s264, 4
      %s271 = sadd.s32 %s269, %s270
      %s272 = smul.addr %s271, 8
      %s273 = scalar_lea.vmem %s4, %s272
      %p274 = pneg %p128
      %p275 = pneg %p125
      %p276 = pneg %p160
      %p277 = pneg %p157
      %s278 = sld [smem:[#allocation6 + %s25]]
      %p279 = scmp.lt.s32.totalorder %s23, 1
      %s280 = scalar_select %p279, %s23, 1
      %p281 = scmp.lt.s32.totalorder %s24, 3
      %s282 = scalar_select %p281, %s24, 3
      %p283 = scmp.lt.s32.totalorder %s278, 0
      %s284 = scalar_select %p283, %s278, 0
      %s285 = sadd.s32 %s284, %s282
      %s286 = smul.addr %s280, 4
      %s287 = sadd.s32 %s285, %s286
      %s288 = smul.addr %s287, 8
      %s289 = scalar_lea.vmem %s5, %s288
      %s290 = sld [smem:[#allocation6 + %s25]]
      %p291 = scmp.lt.s32.totalorder %s23, 1
      %s292 = scalar_select %p291, %s23, 1
      %p293 = scmp.lt.s32.totalorder %s24, 3
      %s294 = scalar_select %p293, %s24, 3
      %p295 = scmp.lt.s32.totalorder %s290, 0
      %s296 = scalar_select %p295, %s290, 0
      %s297 = sadd.s32 %s296, %s294
      %s298 = smul.addr %s292, 4
      %s299 = sadd.s32 %s297, %s298
      %s300 = smul.addr %s299, 8
      %s301 = scalar_lea.vmem %s2, %s300
      %s302 = sld [smem:[#allocation6 + %s25]]
      %s303 = sld [smem:[#allocation7 + %s25]]
      %p304 = scmp.lt.s32.totalorder %s23, 1
      %s305 = scalar_select %p304, %s23, 1
      %p306 = scmp.lt.s32.totalorder %s24, 3
      %s307 = scalar_select %p306, %s24, 3
      %p308 = scmp.lt.s32.totalorder %s303, 0
      %s309 = scalar_select %p308, %s303, 0
      %s310 = sadd.s32 %s309, %s307
      %s311 = smul.addr %s305, 4
      %s312 = sadd.s32 %s310, %s311
      %s313 = smul.addr %s312, 8
      %s314 = scalar_lea.vmem %s3, %s313
      %s315 = sld [smem:[#allocation7 + %s25]]
      %s316 = sld [smem:[#allocation7 + %s25]]
      %p317 = scmp.lt.s32.totalorder %s23, 1
      %s318 = scalar_select %p317, %s23, 1
      %p319 = scmp.lt.s32.totalorder %s24, 3
      %s320 = scalar_select %p319, %s24, 3
      %p321 = scmp.lt.s32.totalorder %s316, 0
      %s322 = scalar_select %p321, %s316, 0
      %s323 = sadd.s32 %s322, %s320
      %s324 = smul.addr %s318, 4
      %s325 = sadd.s32 %s323, %s324
      %s326 = smul.addr %s325, 8
      %s327 = scalar_lea.vmem %s4, %s326
      %s328 = sld [smem:[#allocation7 + %s25]]
      %s329 = sld [smem:[#allocation6 + %s25]]
      %p330 = scmp.lt.s32.totalorder %s23, 1
      %s331 = scalar_select %p330, %s23, 1
      %p332 = scmp.lt.s32.totalorder %s24, 3
      %s333 = scalar_select %p332, %s24, 3
      %p334 = scmp.lt.s32.totalorder %s329, 0
      %s335 = scalar_select %p334, %s329, 0
      %s336 = sadd.s32 %s335, %s333
      %s337 = smul.addr %s331, 4
      %s338 = sadd.s32 %s336, %s337
      %s339 = smul.addr %s338, 8
      %s340 = scalar_lea.vmem %s5, %s339
      %s341 = sld [smem:[#allocation6 + %s25]]
      %s342 = sld [smem:[#allocation6 + %s25]]
      %s343 = sld [smem:[#allocation7 + %s25]]
      %p344 = scmp.eq.s32.totalorder %s343, 0
      // Predicated region
      $region33: #{opt_flash_attention2_forward.4} parent=31 // pred_check
        %p345 = pneg %p344
      $region34: #{opt_flash_attention2_forward.4} parent=31 // pred_check_branch
        %347 = sbr.rel (%p345) target = $region36
      $region35: #{opt_flash_attention2_forward.4} parent=31 // pred_region
        %vm348 = vcmask 7168
        %349 = vst.msk [vmem:[#allocation2] sm:$0xff] %vm348, -1e+30
        %350 = vst.msk [vmem:[#allocation3] sm:$0xff] %vm348, 0.0
        %vm351 = vcmask 64512
        %352 = vst.msk [vmem:[#allocation4] sm:$0xff] %vm351, 0.0
      $region36: #{opt_flash_attention2_forward.4} parent=31 // pred_fallthru
        _
      %v353 = vld [vmem:[%s301] sm:$0xff]
      %v354 = vld [vmem:[%s314] sm:$0xff]
      %v355 = vld [vmem:[%s327] sm:$0xff]
      %p356 = scmp.lt.s32.totalorder %s343, %s342
      // Predicated region
      $region37: #{opt_flash_attention2_forward.4} parent=31 // pred_check
        %p357 = pneg %p356
      $region38: #{opt_flash_attention2_forward.4} parent=31 // pred_check_branch
        %359 = sbr.rel (%p357) target = $region40
      $region39: #{opt_flash_attention2_forward.4} parent=31 // pred_region
        %vm360 = vcmask 64512
        %v362 = vsel %vm360, %v353, 0
        %364 = vmatpush.msra.mxu0 0.0
        %365 = vmatpush.msra.mxu0 0.0
        %366 = vmatpush.msra.mxu0 0.0
        %367 = vmatpush.msra.mxu0 0.0
        %368 = vmatpush.msra.mxu0 0.0
        %369 = vmatpush.msra.mxu0 0.0
        %370 = vmatpush.msra.mxu0 0.0
        %371 = vmatpush.msra.mxu0 0.0
        %372 = vmatpush.msra.mxu0 0.0
        %373 = vmatpush.msra.mxu0 0.0
        %374 = vmatpush.msra.mxu0 0.0
        %375 = vmatpush.msra.mxu0 0.0
        %376 = vmatpush.msra.mxu0 0.0
        %377 = vmatpush.msra.mxu0 0.0
        %378 = vmatpush.msra.mxu0 0.0
        %379 = vmatpush.msra.mxu0 %v354
        %380 = vmatmul.f32.gmra.mxu0 %v362
        %v381 = vpop.f32.mrf.mxu0
        %v382 = vadd.f32 0.0, %v381
        %383 = vdwg.mxu0
        %v384 = vmul.f32 %v382, 0.35355338
        %v385 = vld [vmem:[#allocation2] sm:$0xff]
        %v386 = vsel %vm360, %v384, -inf
        %387 = vmax.xlane.f32.xlu0 %v386
        %v388 = vpop.xlane.xlu0 %387
        %v389 = vmax.f32 %v385, %v388
        %v390 = vsub.f32 %v385, %v389
        %v391 = vmul.f32 %v390, 1.442695
        %v392 = vpow.pop %v391
        %394 = vset.pattern.permute.xlu0 0
        %395 = vperm.xlu0 %394, %v389
        %v396 = vpop.permute.xlu0 %395
        %v398 = vsub.f32 %v384, %v396
        %v399 = vmul.f32 %v398, 1.442695
        %v400 = vpow.pop %v399
        %v401 = vld [vmem:[#allocation3] sm:$0xff]
        %v402 = vmul.f32 %v392, %v401
        %v403 = vsel %vm360, %v400, 0.0
        %404 = vadd.xlane.f32.xlu0 %v403
        %v405 = vpop.xlane.xlu0 %404
        %v406 = vadd.f32 %v402, %v405
        %vm407 = vcmask 7168
        %408 = vst.msk [vmem:[#allocation3] sm:$0xff] %vm407, %v406
        %v410 = vsel %vm360, %v400, 0
        %412 = vmatpush.msra.mxu0 0.0
        %413 = vmatpush.msra.mxu0 0.0
        %414 = vmatpush.msra.mxu0 0.0
        %415 = vmatpush.msra.mxu0 0.0
        %416 = vmatpush.msra.mxu0 0.0
        %417 = vmatpush.msra.mxu0 0.0
        %418 = vmatpush.msra.mxu0 0.0
        %419 = vmatpush.msra.mxu0 0.0
        %420 = vmatpush.msra.mxu0 0.0
        %421 = vmatpush.msra.mxu0 0.0
        %422 = vmatpush.msra.mxu0 0.0
        %423 = vmatpush.msra.mxu0 0.0
        %424 = vmatpush.msra.mxu0 0.0
        %425 = vmatpush.msra.mxu0 0.0
        %426 = vmatpush.msra.mxu0 0.0
        %427 = vmatpush.msra.mxu0 %v355
        %428 = vmatmul.f32.gmra.mxu0 %v410
        %v429 = vpop.f32.mrf.mxu0
        %v430 = vadd.f32 0.0, %v429
        %431 = vdwg.mxu0
        %v432 = vld [vmem:[#allocation4] sm:$0xff]
        %434 = vset.pattern.permute.xlu0 0
        %435 = vperm.xlu0 %434, %v392
        %v436 = vpop.permute.xlu0 %435
        %v438 = vmul.f32 %v436, %v432
        %v439 = vadd.f32 %v438, %v430
        %440 = vst.msk [vmem:[#allocation4] sm:$0xff] %vm360, %v439
        %441 = vst.msk [vmem:[#allocation2] sm:$0xff] %vm407, %v389
      $region40: #{opt_flash_attention2_forward.4} parent=31 // pred_fallthru
        _
      %p442 = scmp.eq.s32.totalorder %s343, %s342
      // Predicated region
      $region41: #{opt_flash_attention2_forward.4} parent=31 // pred_check
        %p443 = pneg %p442
      $region42: #{opt_flash_attention2_forward.4} parent=31 // pred_check_branch
        %445 = sbr.rel (%p443) target = $region44
      $region43: #{opt_flash_attention2_forward.4} parent=31 // pred_region
        %vm446 = vcmask 64512
        %v448 = vsel %vm446, %v353, 0
        %450 = vmatpush.msra.mxu0 0.0
        %451 = vmatpush.msra.mxu0 0.0
        %452 = vmatpush.msra.mxu0 0.0
        %453 = vmatpush.msra.mxu0 0.0
        %454 = vmatpush.msra.mxu0 0.0
        %455 = vmatpush.msra.mxu0 0.0
        %456 = vmatpush.msra.mxu0 0.0
        %457 = vmatpush.msra.mxu0 0.0
        %458 = vmatpush.msra.mxu0 0.0
        %459 = vmatpush.msra.mxu0 0.0
        %460 = vmatpush.msra.mxu0 0.0
        %461 = vmatpush.msra.mxu0 0.0
        %462 = vmatpush.msra.mxu0 0.0
        %463 = vmatpush.msra.mxu0 0.0
        %464 = vmatpush.msra.mxu0 0.0
        %465 = vmatpush.msra.mxu0 %v354
        %466 = vmatmul.f32.gmra.mxu0 %v448
        %v467 = vpop.f32.mrf.mxu0
        %v468 = vadd.f32 0.0, %v467
        %469 = vdwg.mxu0
        %v470 = vmul.f32 %v468, 0.35355338
        %v471 = vlaneseq
        %v472 = vshrl.u32 %v471, 7
        %v473 = vlaneseq
        %v474 = vand.u32 %v473, 127
        %vm475 = vcmp.le.s32.totalorder %v474, %v472
        %v476 = vsel %vm475, %v470, -1e+30
        %v477 = vld [vmem:[#allocation2] sm:$0xff]
        %v478 = vsel %vm446, %v476, -inf
        %479 = vmax.xlane.f32.xlu0 %v478
        %v480 = vpop.xlane.xlu0 %479
        %v481 = vmax.f32 %v477, %v480
        %v482 = vsub.f32 %v477, %v481
        %v483 = vmul.f32 %v482, 1.442695
        %v484 = vpow.pop %v483
        %486 = vset.pattern.permute.xlu0 0
        %487 = vperm.xlu0 %486, %v481
        %v488 = vpop.permute.xlu0 %487
        %v490 = vsub.f32 %v476, %v488
        %v491 = vmul.f32 %v490, 1.442695
        %v492 = vpow.pop %v491
        %v493 = vld [vmem:[#allocation3] sm:$0xff]
        %v494 = vmul.f32 %v484, %v493
        %v495 = vsel %vm446, %v492, 0.0
        %496 = vadd.xlane.f32.xlu0 %v495
        %v497 = vpop.xlane.xlu0 %496
        %v498 = vadd.f32 %v494, %v497
        %vm499 = vcmask 7168
        %500 = vst.msk [vmem:[#allocation3] sm:$0xff] %vm499, %v498
        %v502 = vsel %vm446, %v492, 0
        %504 = vmatpush.msra.mxu0 0.0
        %505 = vmatpush.msra.mxu0 0.0
        %506 = vmatpush.msra.mxu0 0.0
        %507 = vmatpush.msra.mxu0 0.0
        %508 = vmatpush.msra.mxu0 0.0
        %509 = vmatpush.msra.mxu0 0.0
        %510 = vmatpush.msra.mxu0 0.0
        %511 = vmatpush.msra.mxu0 0.0
        %512 = vmatpush.msra.mxu0 0.0
        %513 = vmatpush.msra.mxu0 0.0
        %514 = vmatpush.msra.mxu0 0.0
        %515 = vmatpush.msra.mxu0 0.0
        %516 = vmatpush.msra.mxu0 0.0
        %517 = vmatpush.msra.mxu0 0.0
        %518 = vmatpush.msra.mxu0 0.0
        %519 = vmatpush.msra.mxu0 %v355
        %520 = vmatmul.f32.gmra.mxu0 %v502
        %v521 = vpop.f32.mrf.mxu0
        %v522 = vadd.f32 0.0, %v521
        %523 = vdwg.mxu0
        %v524 = vld [vmem:[#allocation4] sm:$0xff]
        %526 = vset.pattern.permute.xlu0 0
        %527 = vperm.xlu0 %526, %v484
        %v528 = vpop.permute.xlu0 %527
        %v530 = vmul.f32 %v528, %v524
        %v531 = vadd.f32 %v530, %v522
        %532 = vst.msk [vmem:[#allocation4] sm:$0xff] %vm446, %v531
        %533 = vst.msk [vmem:[#allocation2] sm:$0xff] %vm499, %v481
        %v534 = vld [vmem:[#allocation3] sm:$0xff]
        %v535 = vrcp.pop %v534
        %v536 = vmul.f32 %v534, %v535
        %v537 = vsub.f32 1.0, %v536
        %v538 = vmul.f32 %v535, %v537
        %v539 = vadd.f32 %v535, %v538
        %vm540 = vweird.f32 %v534
        %vm541 = vweird.f32 %v535
        %vm542 = vmor %vm540, %vm541
        %v543 = vsel %vm542, %v535, %v539
        %v544 = vand.u32 2147483647, %v534
        %vm545 = vcmp.eq.f32.partialorder %v544, 8.507059e+37
        %v546 = vand.u32 %v534, 2147483648
        %v547 = vor.u32 1.1754944e-38, %v546
        %v548 = vsel %vm545, %v547, %v543
        %v549 = vld [vmem:[#allocation4] sm:$0xff]
        %551 = vset.pattern.permute.xlu0 0
        %552 = vperm.xlu0 %551, %v548
        %v553 = vpop.permute.xlu0 %552
        %v555 = vmul.f32 %v549, %v553
        %556 = vst.msk [vmem:[%s340] sm:$0xff] %vm446, %v555
      $region44: #{opt_flash_attention2_forward.4} parent=31 // pred_fallthru
        _
      %s557 = sld [smem:[#allocation6 + %s25]]
      %p558 = scmp.lt.s32.totalorder %s23, 1
      %s559 = scalar_select %p558, %s23, 1
      %p560 = scmp.lt.s32.totalorder %s24, 3
      %s561 = scalar_select %p560, %s24, 3
      %p562 = scmp.lt.s32.totalorder %s557, 0
      %s563 = scalar_select %p562, %s557, 0
      %s564 = sadd.s32 %s563, %s561
      %s565 = smul.addr %s559, 4
      %s566 = sadd.s32 %s564, %s565
      %s567 = smul.addr %s566, 8
      %s568 = scalar_lea.vmem %s5, %s567
      // Predicated region
      $region45: #{opt_flash_attention2_forward.4} parent=31 // pred_check
        %p569 = pneg %p157
      $region46: #{opt_flash_attention2_forward.4} parent=31 // pred_check_branch
        %571 = sbr.rel (%p569) target = $region48
      $region47: #{opt_flash_attention2_forward.4} parent=31 // pred_region
        %s572 = sld [smem:[#allocation6 + %s25]]
      $region48: #{opt_flash_attention2_forward.4} parent=31 // pred_fallthru
        _
    $region32: #{opt_flash_attention2_forward.4} parent=5 // pred_fallthru
      _
    %p573 = scmp.le.s32.totalorder 2, %s13
    // Predicated region
    $region49: #{opt_flash_attention2_forward.4} parent=5 // pred_check
      %p574 = pneg %p573
    $region50: #{opt_flash_attention2_forward.4} parent=5 // pred_check_branch
      %576 = sbr.rel (%p574) target = $region52
    $region51: #{opt_flash_attention2_forward.4} parent=5 // pred_region
      %s577 = ssub.s32 %s13, 2
      // Predicated region
      $region53: #{opt_flash_attention2_forward.4} parent=51 // pred_check
        %p578 = pneg %p163
      $region54: #{opt_flash_attention2_forward.4} parent=51 // pred_check_branch
        %580 = sbr.rel (%p578) target = $region56
      $region55: #{opt_flash_attention2_forward.4} parent=51 // pred_region
        %s581 = sld [smem:[#allocation6 + %s28]]
        %p582 = scmp.lt.s32.totalorder %s26, 1
        %s583 = scalar_select %p582, %s26, 1
        %p584 = scmp.lt.s32.totalorder %s27, 3
        %s585 = scalar_select %p584, %s27, 3
        %p586 = scmp.lt.s32.totalorder %s581, 0
        %s587 = scalar_select %p586, %s581, 0
        %s588 = sadd.s32 %s587, %s585
        %s589 = smul.addr %s583, 4
        %s590 = sadd.s32 %s588, %s589
        %s591 = smul.addr %s590, 8
        %s592 = scalar_lea.vmem %s5, %s591
      $region56: #{opt_flash_attention2_forward.4} parent=51 // pred_fallthru
        _
    $region52: #{opt_flash_attention2_forward.4} parent=5 // pred_fallthru
      _
  $region6: #{opt_flash_attention2_forward.4} parent=0 // loop_footer
    %s17 = sadd.s32 1, %s13
  $region7: #{opt_flash_attention2_forward.4} parent=0 // loop_footer_branch
    %12 = sbr.rel target = $region3
  $region8: #{opt_flash_attention2_forward.4} parent=0 // loop_exit
    _

// kernel: opt_flash_attention2_forward.5
$region0: #{opt_flash_attention2_forward.5}
  #allocation0 [shape = 'u32[]', space=smem, size = 0x4, offset = 0x4, fixed_abs, tag = 'smem constant byte address 0x4 - core index']
  #allocation1 [shape = 'u32[72,128]{1,0:T(1,128)}', space=vmem, size = 0x9000, scoped, tag = 'internal scratch']
  #allocation2 [shape = 'f32[16,32]{1,0:T(8,128)}', space=vmem, size = 0x2000, scoped, tag = 'scratch operand']
  %s0 = inlined_call_operand.vmem [shape: f32[16,32], index: 0, kind: input, shape index: {}]
  %s1 = inlined_call_operand.vmem [shape: f32[32,32], index: 1, kind: input, shape index: {}]
  %s2 = inlined_call_operand.vmem [shape: f32[1,32], index: 2, kind: input, shape index: {}]
  %s3 = inlined_call_operand.hbm [shape: f32[16,32], index: 3, kind: output, shape index: {}]
  %s4 = sld [smem:[#allocation0]]
  $region30: #{opt_flash_attention2_forward.5} parent=0
    _
  %s6 = ssub.s32 1, %s4
  %s7 = scalar_select 0, %s6, %s4
  $region1: #{opt_flash_attention2_forward.5} parent=0
    #allocation3 [shape = 'u8[8192]{0}', space=vmem, size = 0x2000, scoped, tag = 'output window, operand 0, single buffered']
    #allocation4 [shape = 's32[1]{0}', space=sflag, size = 0x4, scoped, tag = 'scoped memory for opt_flash_attention2_forward.5']
    %8 = vsyncpa [#allocation4], 0
    // Predicated region
    $region2: #{opt_flash_attention2_forward.5} parent=1 // pred_check
      _
    $region3: #{opt_flash_attention2_forward.5} parent=1 // pred_check_branch
      %10 = sbr.rel (0) target = $region5
    $region4: #{opt_flash_attention2_forward.5} parent=1 // pred_region
      _
    $region5: #{opt_flash_attention2_forward.5} parent=1 // pred_fallthru
      _
    // Predicated region
    $region6: #{opt_flash_attention2_forward.5} parent=1 // pred_check
      _
    $region7: #{opt_flash_attention2_forward.5} parent=1 // pred_check_branch
      %12 = sbr.rel (0) target = $region9
    $region8: #{opt_flash_attention2_forward.5} parent=1 // pred_region
      _
    $region9: #{opt_flash_attention2_forward.5} parent=1 // pred_fallthru
      _
    // Predicated region
    $region10: #{opt_flash_attention2_forward.5} parent=1 // pred_check
      _
    $region11: #{opt_flash_attention2_forward.5} parent=1 // pred_check_branch
      %14 = sbr.rel (0) target = $region13
    $region12: #{opt_flash_attention2_forward.5} parent=1 // pred_region
      _
    $region13: #{opt_flash_attention2_forward.5} parent=1 // pred_fallthru
      _
    %p15 = scmp.eq.s32.totalorder 0, 0
    // Predicated region
    $region14: #{opt_flash_attention2_forward.5} parent=1 // pred_check
      %p16 = pneg %p15
    $region15: #{opt_flash_attention2_forward.5} parent=1 // pred_check_branch
      %18 = sbr.rel (%p16) target = $region17
    $region16: #{opt_flash_attention2_forward.5} parent=1 // pred_region
      %vm19 = vcmask 261120
      %20 = vst.msk [vmem:[#allocation2] sm:$0xff] %vm19, 0.0
      %21 = vst.msk [vmem:[#allocation2 + $0x8] sm:$0xff] %vm19, 0.0
    $region17: #{opt_flash_attention2_forward.5} parent=1 // pred_fallthru
      _
    %v22 = vld [vmem:[#allocation2] sm:$0xff]
    %v23 = vld [vmem:[#allocation2 + $0x8] sm:$0xff]
    %v24 = vld [vmem:[%s0] sm:$0xff]
    %v25 = vld [vmem:[%s0 + $0x8] sm:$0xff]
    %v26 = vld [vmem:[%s1] sm:$0xff]
    %v27 = vld [vmem:[%s1 + $0x8] sm:$0xff]
    %v28 = vld [vmem:[%s1 + $0x10] sm:$0xff]
    %v29 = vld [vmem:[%s1 + $0x18] sm:$0xff]
    %vm30 = vcmask 261120
    %v32 = vsel %vm30, %v24, 0
    %v35 = vsel %vm30, %v25, 0
    %37 = vmatpush.msra.mxu0 0.0
    %38 = vmatpush.msra.mxu0 0.0
    %39 = vmatpush.msra.mxu0 0.0
    %40 = vmatpush.msra.mxu0 0.0
    %41 = vmatpush.msra.mxu0 0.0
    %42 = vmatpush.msra.mxu0 0.0
    %43 = vmatpush.msra.mxu0 0.0
    %44 = vmatpush.msra.mxu0 0.0
    %45 = vmatpush.msra.mxu0 0.0
    %46 = vmatpush.msra.mxu0 0.0
    %47 = vmatpush.msra.mxu0 0.0
    %48 = vmatpush.msra.mxu0 0.0
    %49 = vmatpush.msra.mxu0 %v29
    %50 = vmatpush.msra.mxu0 %v28
    %51 = vmatpush.msra.mxu0 %v27
    %52 = vmatpush.msra.mxu0 %v26
    %53 = vmatmul.f32.gmra.mxu0 %v32
    %v54 = vpop.f32.mrf.mxu0
    %v55 = vadd.f32 0.0, %v54
    %56 = vmatmul.f32.gmra.mxu0 %v35
    %v57 = vpop.f32.mrf.mxu0
    %v58 = vadd.f32 0.0, %v57
    %59 = vdwg.mxu0
    %v60 = vadd.f32 %v22, %v55
    %v61 = vadd.f32 %v23, %v58
    %62 = vst.msk [vmem:[#allocation2] sm:$0xff] %vm30, %v60
    %63 = vst.msk [vmem:[#allocation2 + $0x8] sm:$0xff] %vm30, %v61
    // Predicated region
    $region18: #{opt_flash_attention2_forward.5} parent=1 // pred_check
      %p64 = pneg %p15
    $region19: #{opt_flash_attention2_forward.5} parent=1 // pred_check_branch
      %66 = sbr.rel (%p64) target = $region21
    $region20: #{opt_flash_attention2_forward.5} parent=1 // pred_region
      %v67 = vld [vmem:[#allocation2] sm:$0xff]
      %v68 = vld [vmem:[#allocation2 + $0x8] sm:$0xff]
      %v69 = vld [vmem:[%s2] sm:$0x1]
      %v71 = vperm.slane %v69, 0
      %v73 = vadd.f32 %v67, %v71
      %v74 = vadd.f32 %v68, %v71
      %75 = vst.msk [vmem:[#allocation3] sm:$0xff] %vm30, %v73
      %76 = vst.msk [vmem:[#allocation3 + $0x8] sm:$0xff] %vm30, %v74
    $region21: #{opt_flash_attention2_forward.5} parent=1 // pred_fallthru
      _
    // Predicated region
    $region22: #{opt_flash_attention2_forward.5} parent=1 // pred_check
      _
    $region23: #{opt_flash_attention2_forward.5} parent=1 // pred_check_branch
      %78 = sbr.rel (0) target = $region25
    $region24: #{opt_flash_attention2_forward.5} parent=1 // pred_region
      %80 = vsyncadd [#allocation4], 0
      %s81 = sshll.u32 [#allocation3], 4
      %s82 = int_to_ptr.vmem [resolvable:$true] %s81
      %s83 = sshll.u32 %s3, 4
      %s84 = int_to_ptr.hbm [resolvable:$true] %s83
      %89 = dma.vmem_to_hbm [thread:$0]  %s82, 256, %s84, [#allocation4], 128, 128, 8
    $region25: #{opt_flash_attention2_forward.5} parent=1 // pred_fallthru
      _
    // Predicated region
    $region26: #{opt_flash_attention2_forward.5} parent=1 // pred_check
      _
    $region27: #{opt_flash_attention2_forward.5} parent=1 // pred_check_branch
      %91 = sbr.rel (0) target = $region29
    $region28: #{opt_flash_attention2_forward.5} parent=1 // pred_region
      %93 = dma.done [#allocation4], 256
    $region29: #{opt_flash_attention2_forward.5} parent=1 // pred_fallthru
      _
    %94 = vsyncpa [#allocation4], 1

</llo_original>
